<compile_context>
chip_gen: v7x
topology: tpu7x:2x2x1
jax: 0.10.0
libtpu: 0.0.40
codegen_flags: <defaults>
</compile_context>

<pallas_src>
import jax
import jax.numpy as jnp
from jax.experimental import pallas as pl
from jax.experimental.pallas import tpu as pltpu

# ---- model hyper-parameters (mirror TransformerClassifier.__init__) ----
N, V, T = 2, 4, 8          # batch, input_size (sensors), sequence length
H = 32                     # hidden_dim
NH = 2                     # num_heads
HD = H // NH               # per-head dim
F = 64                     # dim_feedforward
C = 2                      # output_size
MAX_LEN = 16               # max_length (>= T)
EPS = 1e-5                 # LayerNorm eps (PyTorch default)

# ---- packed-parameter layout --------------------------------------------
# w_h  (H, 512) bf16 : fan_in==H weights, each block 128-lane aligned:
#                      [Wqkv|pad][Wo|pad][W1|pad][Wout|pad]
# w_m  (F, H)  bf16  : encoder linear2 weight (fan_in == F)
# vecs (32,128) f32  : bias / LN rows, pre-tiled positional encoding,
#                      embedding weight (kept f32, tiny).
OFF_QKV, OFF_WO, OFF_W1, OFF_WOUT = 0, 128, 256, 384
WH_COLS = 512
(ROW_BQKV, ROW_BEMB, ROW_BO, ROW_B1, ROW_B2,
 ROW_LN1G, ROW_LN1B, ROW_LN2G, ROW_LN2B,
 ROW_LNOG, ROW_LNOB, ROW_BOUT) = range(12)
ROW_P = 12                  # N*T rows of pre-tiled positional encoding
ROW_WEMB = ROW_P + N * T    # V rows of embedding weight
VEC_ROWS = 32
VEC_COLS = 128


def _layernorm(x, g, b):
    """LayerNorm over last axis; single-pass variance so the two cross-lane
    reductions (sum(x), sum(x*x)) are independent (shorter XLU chain)."""
    mu = jnp.mean(x, axis=-1, keepdims=True)
    ms = jnp.mean(x * x, axis=-1, keepdims=True)
    var = ms - mu * mu
    return (x - mu) * jax.lax.rsqrt(var + EPS) * g + b


def transformer_kernel(x_ref, wh_ref, wm_ref, vec_ref, out_ref):
    f32, bf16 = jnp.float32, jnp.bfloat16

    # --- unpack bias / LN / positional / embedding rows (static ref windows)
    def vrow(r, width):
        return vec_ref[r:r + 1, 0:width]
    bqkv = vrow(ROW_BQKV, 3 * H)
    bemb = vrow(ROW_BEMB, H)
    bo   = vrow(ROW_BO, H)
    b1   = vrow(ROW_B1, F)
    b2   = vrow(ROW_B2, H)
    ln1g, ln1b = vrow(ROW_LN1G, H), vrow(ROW_LN1B, H)
    ln2g, ln2b = vrow(ROW_LN2G, H), vrow(ROW_LN2B, H)
    lnog, lnob = vrow(ROW_LNOG, H), vrow(ROW_LNOB, H)
    bout = vrow(ROW_BOUT, C)
    p_tiled = vec_ref[ROW_P:ROW_P + N * T, 0:H]            # (N*T, H)
    wemb = vec_ref[ROW_WEMB:ROW_WEMB + V, 0:H]             # (V, H)

    # --- embed: Linear(V->H) on inputs.transpose(2,1), written as a
    # contraction over V so the MXU absorbs the transpose (no in-kernel XLU
    # transpose / concat).  pos_dropout == identity (eval mode).
    wemb_b = jnp.broadcast_to(wemb.reshape(1, V, H), (N, V, H))
    e = (jnp.einsum('nvt,nvh->nth', x_ref[...], wemb_b,
                    preferred_element_type=f32).reshape(N * T, H)
         + bemb + p_tiled)                                 # (N*T, H) f32

    # --- fused QKV projection (1/sqrt(HD) pre-folded into Wq/bq host-side)
    qkv = jnp.dot(e.astype(bf16), wh_ref[:, OFF_QKV:OFF_QKV + 3 * H],
                  preferred_element_type=f32) + bqkv       # (N*T, 3H) f32
    qkv3 = qkv.reshape(N, T, 3 * H)

    # --- per-head attention; out_proj folded per head (no lane concat)
    head_outs = []
    for h in range(NH):                                    # static unroll
        qh = qkv3[:, :, h * HD:(h + 1) * HD].astype(bf16)
        kh = qkv3[:, :, H + h * HD:H + (h + 1) * HD].astype(bf16)
        vh = qkv3[:, :, 2 * H + h * HD:2 * H + (h + 1) * HD].astype(bf16)
        s = jnp.einsum('ntd,nsd->nts', qh, kh, preferred_element_type=f32)
        s = s - jnp.max(s, axis=-1, keepdims=True)
        p = jnp.exp(s)
        p = p * pl.reciprocal(jnp.sum(p, axis=-1, keepdims=True), approx=True)
        oh = jnp.einsum('nts,nsd->ntd', p.astype(bf16), vh,
                        preferred_element_type=f32)        # (N, T, HD)
        head_outs.append(
            jnp.dot(oh.reshape(N * T, HD).astype(bf16),
                    wh_ref[h * HD:(h + 1) * HD, OFF_WO:OFF_WO + H],
                    preferred_element_type=f32))           # (N*T, H)
    attn_out = sum(head_outs) + bo

    x1 = _layernorm(e + attn_out, ln1g, ln1b)

    # --- feed-forward (ReLU) + residual + post-LN ---------------------------
    hdn = jnp.maximum(
        jnp.dot(x1.astype(bf16), wh_ref[:, OFF_W1:OFF_W1 + F],
                preferred_element_type=f32) + b1, 0.0)
    ff = jnp.dot(hdn.astype(bf16), wm_ref[...], preferred_element_type=f32) + b2
    x2 = _layernorm(x1 + ff, ln2g, ln2b)

    # --- norm_out, mean over T (1/T pre-folded into Wout), Linear(H -> C) ---
    y = _layernorm(x2, lnog, lnob).reshape(N, T, H)
    pooled = jnp.sum(y, axis=1)                            # (N, H)
    out_ref[...] = jnp.dot(pooled.astype(bf16),
                           wh_ref[:, OFF_WOUT:OFF_WOUT + C],
                           preferred_element_type=f32) + bout


@jax.jit
def transformer_classifier(x_nvt, params):
    args = (x_nvt.astype(jnp.float32),
            params['w_h'], params['w_m'], params['vecs'])
    vmem = pltpu.MemorySpace.VMEM
    return pl.pallas_call(
        transformer_kernel,
        out_shape=jax.ShapeDtypeStruct((N, C), jnp.float32),
        in_specs=[pl.BlockSpec(memory_space=vmem)] * len(args),
        out_specs=pl.BlockSpec(memory_space=vmem),
        # Deliberately gridless / single TensorCore: at N*T=16 the kernel is
        # launch/latency bound and all slabs are <100 KB, so a grid or a v7x
        # megacore split is pure overhead.  When scaling up, add a row grid
        # over N*T ("parallel"), keep the weight slabs on constant index_maps,
        # and re-derive the activation tile per generation (64 MiB VMEM on
        # v7x vs 128 MiB on v5e/v6e; raise vmem_limit_bytes past the scoped
        # default).
    )(*args)


def init_params(key):
    """Deterministic synthetic parameters, packed into 3 slabs."""
    def lin(k, fan_in, fan_out):
        # weights stored pre-transposed (fan_in, fan_out): kernel does x @ W_t
        bound = 1.0 / (fan_in ** 0.5)
        w = jax.random.uniform(k, (fan_in, fan_out), jnp.float32, -bound, bound)
        b = jax.random.uniform(jax.random.fold_in(k, 1), (fan_out,),
                               jnp.float32, -bound, bound)
        return w, b

    ks = jax.random.split(key, 8)
    wemb_t, bemb = lin(ks[0], V, H)          # embeddingL: Linear(V, H)
    wq_t, bq = lin(ks[1], H, H)              # in_proj query slice
    wk_t, bk = lin(ks[2], H, H)              # in_proj key slice
    wv_t, bv = lin(ks[3], H, H)              # in_proj value slice
    wo_t, bo = lin(ks[4], H, H)              # attention out_proj
    w1_t, b1 = lin(ks[5], H, F)              # encoder linear1
    w2_t, b2 = lin(ks[6], F, H)              # encoder linear2
    wout_t, bout = lin(ks[7], H, C)          # output_layer: Linear(H, C)

    # host-side constant folding (review): attention scale and mean-pool 1/T
    scale = 1.0 / (HD ** 0.5)
    wq_t, bq = wq_t * scale, bq * scale
    wout_t = wout_t * (1.0 / T)              # bout intentionally NOT scaled

    # sinusoidal positional encoding, pre-tiled over batch -> (N*T, H)
    Xp = (jnp.arange(MAX_LEN, dtype=jnp.float32)[:, None]
          / jnp.power(10000.0, jnp.arange(0, H, 2, dtype=jnp.float32) / H))
    P = jnp.zeros((MAX_LEN, H), jnp.float32)
    P = P.at[:, 0::2].set(jnp.sin(Xp)).at[:, 1::2].set(jnp.cos(Xp))
    p_tiled = jnp.tile(P[:T, :], (N, 1))

    ones = jnp.ones((H,), jnp.float32)
    zeros = jnp.zeros((H,), jnp.float32)

    # --- slab 1: fan_in==H weights, each block aligned to a 128-lane boundary
    w_h = jnp.zeros((H, WH_COLS), jnp.float32)
    w_h = w_h.at[:, OFF_QKV:OFF_QKV + 3 * H].set(
        jnp.concatenate([wq_t, wk_t, wv_t], axis=1))
    w_h = w_h.at[:, OFF_WO:OFF_WO + H].set(wo_t)
    w_h = w_h.at[:, OFF_W1:OFF_W1 + F].set(w1_t)
    w_h = w_h.at[:, OFF_WOUT:OFF_WOUT + C].set(wout_t)

    # --- slab 2: encoder linear2 weight (fan_in == F) ---
    w_m = w2_t

    # --- slab 3: biases / LN vectors / tiled P / embedding weight, (32,128) ---
    def row(v):
        return jnp.zeros((1, VEC_COLS), jnp.float32).at[0, :v.shape[0]].set(v)
    vec_rows = [row(jnp.concatenate([bq, bk, bv])),      # fused QKV bias
                row(bemb), row(bo), row(b1), row(b2),
                row(ones), row(zeros),                   # encoder norm1
                row(ones), row(zeros),                   # encoder norm2
                row(ones), row(zeros),                   # norm_out
                row(bout)]
    p_slab = jnp.zeros((N * T, VEC_COLS), jnp.float32).at[:, :H].set(p_tiled)
    e_slab = jnp.zeros((V, VEC_COLS), jnp.float32).at[:, :H].set(wemb_t)
    vecs = jnp.concatenate(vec_rows + [p_slab, e_slab], axis=0)
    assert vecs.shape == (VEC_ROWS, VEC_COLS)

    return dict(w_h=w_h.astype(jnp.bfloat16),   # MXU-only slabs in bf16
                w_m=w_m.astype(jnp.bfloat16),
                vecs=vecs)                      # elementwise operands stay f32


if __name__ == "__main__":
    key = jax.random.PRNGKey(0)
    kx, kp = jax.random.split(key)
    # forward() takes (N, V, T); nn.Linear needs floats, so use continuous
    # sensor-like values.
    x = jax.random.normal(kx, (N, V, T), jnp.float32)
    params = init_params(kp)

    out = transformer_classifier(x, params)
    out = jax.block_until_ready(out)
    assert out.shape == (N, C), out.shape
    assert bool(jnp.all(jnp.isfinite(out)))
    print("KERNEL_OK")
</pallas_src>

<mosaic_0001>
module attributes {stable_mosaic.version = 11 : i64} {
  func.func @transformer_kernel(%arg0: memref<2x4x8xf32, #tpu.memory_space<vmem>>, %arg1: memref<32x512xbf16, #tpu.memory_space<vmem>>, %arg2: memref<64x32xbf16, #tpu.memory_space<vmem>>, %arg3: memref<32x128xf32, #tpu.memory_space<vmem>>, %arg4: memref<2x2xf32, #tpu.memory_space<vmem>>) attributes {dimension_semantics = [], scalar_prefetch = 0 : i64, scratch_operands = 0 : i64, tpu.core_type = #tpu.core_type<tc>} {
    %c0 = arith.constant 0 : index
    %c0_0 = arith.constant 0 : index
    %0 = vector.load %arg3[%c0, %c0_0] : memref<32x128xf32, #tpu.memory_space<vmem>>, vector<1x96xf32>
    %c1 = arith.constant 1 : index
    %c0_1 = arith.constant 0 : index
    %1 = vector.load %arg3[%c1, %c0_1] : memref<32x128xf32, #tpu.memory_space<vmem>>, vector<1x32xf32>
    %c2 = arith.constant 2 : index
    %c0_2 = arith.constant 0 : index
    %2 = vector.load %arg3[%c2, %c0_2] : memref<32x128xf32, #tpu.memory_space<vmem>>, vector<1x32xf32>
    %c3 = arith.constant 3 : index
    %c0_3 = arith.constant 0 : index
    %3 = vector.load %arg3[%c3, %c0_3] : memref<32x128xf32, #tpu.memory_space<vmem>>, vector<1x64xf32>
    %c4 = arith.constant 4 : index
    %c0_4 = arith.constant 0 : index
    %4 = vector.load %arg3[%c4, %c0_4] : memref<32x128xf32, #tpu.memory_space<vmem>>, vector<1x32xf32>
    %c5 = arith.constant 5 : index
    %c0_5 = arith.constant 0 : index
    %5 = vector.load %arg3[%c5, %c0_5] : memref<32x128xf32, #tpu.memory_space<vmem>>, vector<1x32xf32>
    %c6 = arith.constant 6 : index
    %c0_6 = arith.constant 0 : index
    %6 = vector.load %arg3[%c6, %c0_6] : memref<32x128xf32, #tpu.memory_space<vmem>>, vector<1x32xf32>
    %c7 = arith.constant 7 : index
    %c0_7 = arith.constant 0 : index
    %7 = vector.load %arg3[%c7, %c0_7] : memref<32x128xf32, #tpu.memory_space<vmem>>, vector<1x32xf32>
    %c8 = arith.constant 8 : index
    %c0_8 = arith.constant 0 : index
    %8 = vector.load %arg3[%c8, %c0_8] : memref<32x128xf32, #tpu.memory_space<vmem>>, vector<1x32xf32>
    %c9 = arith.constant 9 : index
    %c0_9 = arith.constant 0 : index
    %9 = vector.load %arg3[%c9, %c0_9] : memref<32x128xf32, #tpu.memory_space<vmem>>, vector<1x32xf32>
    %c10 = arith.constant 10 : index
    %c0_10 = arith.constant 0 : index
    %10 = vector.load %arg3[%c10, %c0_10] : memref<32x128xf32, #tpu.memory_space<vmem>>, vector<1x32xf32>
    %c11 = arith.constant 11 : index
    %c0_11 = arith.constant 0 : index
    %11 = vector.load %arg3[%c11, %c0_11] : memref<32x128xf32, #tpu.memory_space<vmem>>, vector<1x2xf32>
    %c12 = arith.constant 12 : index
    %c0_12 = arith.constant 0 : index
    %12 = vector.load %arg3[%c12, %c0_12] : memref<32x128xf32, #tpu.memory_space<vmem>>, vector<16x32xf32>
    %c28 = arith.constant 28 : index
    %c0_13 = arith.constant 0 : index
    %13 = vector.load %arg3[%c28, %c0_13] : memref<32x128xf32, #tpu.memory_space<vmem>>, vector<4x32xf32>
    %14 = vector.shape_cast %13 : vector<4x32xf32> to vector<1x4x32xf32>
    %15 = vector.shape_cast %14 : vector<1x4x32xf32> to vector<1x4x32xf32>
    %16 = vector.broadcast %15 : vector<1x4x32xf32> to vector<2x4x32xf32>
    %c0_14 = arith.constant 0 : index
    %c0_15 = arith.constant 0 : index
    %c0_16 = arith.constant 0 : index
    %17 = vector.load %arg0[%c0_14, %c0_15, %c0_16] : memref<2x4x8xf32, #tpu.memory_space<vmem>>, vector<2x4x8xf32>
    "tpu.trace_start"() <{level = 10 : i32, message = "nvt,nvh->nth"}> : () -> ()
    %cst = arith.constant dense<0.000000e+00> : vector<2x8x32xf32>
    %18 = tpu.matmul %17, %16, %cst {dimension_numbers = #tpu.dot_dimension_numbers<[1], [1], [2], [2], [0, 0, 0, 2, 1, 2], [0], [0]>} : vector<2x4x8xf32>, vector<2x4x32xf32>, vector<2x8x32xf32> -> vector<2x8x32xf32>
    "tpu.trace_stop"() : () -> ()
    %19 = vector.shape_cast %18 : vector<2x8x32xf32> to vector<16x32xf32>
    %20 = vector.broadcast %1 : vector<1x32xf32> to vector<16x32xf32>
    %21 = arith.addf %19, %20 : vector<16x32xf32>
    %22 = arith.addf %21, %12 : vector<16x32xf32>
    %23 = arith.truncf %22 : vector<16x32xf32> to vector<16x32xbf16>
    %c0_17 = arith.constant 0 : index
    %c0_18 = arith.constant 0 : index
    %24 = vector.load %arg1[%c0_17, %c0_18] : memref<32x512xbf16, #tpu.memory_space<vmem>>, vector<32x96xbf16>
    %cst_19 = arith.constant dense<0.000000e+00> : vector<16x96xf32>
    %25 = tpu.matmul %23, %24, %cst_19 {dimension_numbers = #tpu.dot_dimension_numbers<[1], [0], [0], [1], [0, 0, 1, 1], [], []>} : vector<16x32xbf16>, vector<32x96xbf16>, vector<16x96xf32> -> vector<16x96xf32>
    %26 = vector.broadcast %0 : vector<1x96xf32> to vector<16x96xf32>
    %27 = arith.addf %25, %26 : vector<16x96xf32>
    %28 = vector.shape_cast %27 : vector<16x96xf32> to vector<2x8x96xf32>
    %29 = vector.extract_strided_slice %28 {offsets = [0, 0, 0], sizes = [2, 8, 16], strides = [1, 1, 1]} : vector<2x8x96xf32> to vector<2x8x16xf32>
    %30 = arith.truncf %29 : vector<2x8x16xf32> to vector<2x8x16xbf16>
    %31 = vector.extract_strided_slice %28 {offsets = [0, 0, 32], sizes = [2, 8, 16], strides = [1, 1, 1]} : vector<2x8x96xf32> to vector<2x8x16xf32>
    %32 = arith.truncf %31 : vector<2x8x16xf32> to vector<2x8x16xbf16>
    %33 = vector.extract_strided_slice %28 {offsets = [0, 0, 64], sizes = [2, 8, 16], strides = [1, 1, 1]} : vector<2x8x96xf32> to vector<2x8x16xf32>
    %34 = arith.truncf %33 : vector<2x8x16xf32> to vector<2x8x16xbf16>
    "tpu.trace_start"() <{level = 10 : i32, message = "ntd,nsd->nts"}> : () -> ()
    %cst_20 = arith.constant dense<0.000000e+00> : vector<2x8x8xf32>
    %35 = tpu.matmul %30, %32, %cst_20 {dimension_numbers = #tpu.dot_dimension_numbers<[2], [2], [1], [1], [0, 0, 0, 1, 1, 1], [0], [0]>} : vector<2x8x16xbf16>, vector<2x8x16xbf16>, vector<2x8x8xf32> -> vector<2x8x8xf32>
    "tpu.trace_stop"() : () -> ()
    %cst_21 = arith.constant dense<0xFF800000> : vector<2x8xf32>
    %36 = vector.multi_reduction <maximumf>, %35, %cst_21 [2] : vector<2x8x8xf32> to vector<2x8xf32>
    %37 = vector.shape_cast %36 : vector<2x8xf32> to vector<2x8x1xf32>
    %38 = vector.broadcast %37 : vector<2x8x1xf32> to vector<2x8x8xf32>
    %39 = arith.subf %35, %38 : vector<2x8x8xf32>
    %40 = math.exp %39 : vector<2x8x8xf32>
    %cst_22 = arith.constant dense<0.000000e+00> : vector<2x8xf32>
    %41 = vector.multi_reduction <add>, %40, %cst_22 [2] : vector<2x8x8xf32> to vector<2x8xf32>
    %42 = vector.shape_cast %41 : vector<2x8xf32> to vector<2x8x1xf32>
    %43 = tpu.reciprocal %42 {approx = true} : vector<2x8x1xf32> -> vector<2x8x1xf32>
    %44 = vector.broadcast %43 : vector<2x8x1xf32> to vector<2x8x8xf32>
    %45 = arith.mulf %40, %44 : vector<2x8x8xf32>
    %46 = arith.truncf %45 : vector<2x8x8xf32> to vector<2x8x8xbf16>
    "tpu.trace_start"() <{level = 10 : i32, message = "nts,nsd->ntd"}> : () -> ()
    %cst_23 = arith.constant dense<0.000000e+00> : vector<2x8x16xf32>
    %47 = tpu.matmul %46, %34, %cst_23 {dimension_numbers = #tpu.dot_dimension_numbers<[2], [1], [1], [2], [0, 0, 0, 1, 1, 2], [0], [0]>} : vector<2x8x8xbf16>, vector<2x8x16xbf16>, vector<2x8x16xf32> -> vector<2x8x16xf32>
    "tpu.trace_stop"() : () -> ()
    %48 = vector.shape_cast %47 : vector<2x8x16xf32> to vector<16x16xf32>
    %49 = arith.truncf %48 : vector<16x16xf32> to vector<16x16xbf16>
    %c0_24 = arith.constant 0 : index
    %c128 = arith.constant 128 : index
    %50 = vector.load %arg1[%c0_24, %c128] : memref<32x512xbf16, #tpu.memory_space<vmem>>, vector<16x32xbf16>
    %cst_25 = arith.constant dense<0.000000e+00> : vector<16x32xf32>
    %51 = tpu.matmul %49, %50, %cst_25 {dimension_numbers = #tpu.dot_dimension_numbers<[1], [0], [0], [1], [0, 0, 1, 1], [], []>} : vector<16x16xbf16>, vector<16x32xbf16>, vector<16x32xf32> -> vector<16x32xf32>
    %52 = vector.extract_strided_slice %28 {offsets = [0, 0, 16], sizes = [2, 8, 16], strides = [1, 1, 1]} : vector<2x8x96xf32> to vector<2x8x16xf32>
    %53 = arith.truncf %52 : vector<2x8x16xf32> to vector<2x8x16xbf16>
    %54 = vector.extract_strided_slice %28 {offsets = [0, 0, 48], sizes = [2, 8, 16], strides = [1, 1, 1]} : vector<2x8x96xf32> to vector<2x8x16xf32>
    %55 = arith.truncf %54 : vector<2x8x16xf32> to vector<2x8x16xbf16>
    %56 = vector.extract_strided_slice %28 {offsets = [0, 0, 80], sizes = [2, 8, 16], strides = [1, 1, 1]} : vector<2x8x96xf32> to vector<2x8x16xf32>
    %57 = arith.truncf %56 : vector<2x8x16xf32> to vector<2x8x16xbf16>
    "tpu.trace_start"() <{level = 10 : i32, message = "ntd,nsd->nts"}> : () -> ()
    %cst_26 = arith.constant dense<0.000000e+00> : vector<2x8x8xf32>
    %58 = tpu.matmul %53, %55, %cst_26 {dimension_numbers = #tpu.dot_dimension_numbers<[2], [2], [1], [1], [0, 0, 0, 1, 1, 1], [0], [0]>} : vector<2x8x16xbf16>, vector<2x8x16xbf16>, vector<2x8x8xf32> -> vector<2x8x8xf32>
    "tpu.trace_stop"() : () -> ()
    %cst_27 = arith.constant dense<0xFF800000> : vector<2x8xf32>
    %59 = vector.multi_reduction <maximumf>, %58, %cst_27 [2] : vector<2x8x8xf32> to vector<2x8xf32>
    %60 = vector.shape_cast %59 : vector<2x8xf32> to vector<2x8x1xf32>
    %61 = vector.broadcast %60 : vector<2x8x1xf32> to vector<2x8x8xf32>
    %62 = arith.subf %58, %61 : vector<2x8x8xf32>
    %63 = math.exp %62 : vector<2x8x8xf32>
    %cst_28 = arith.constant dense<0.000000e+00> : vector<2x8xf32>
    %64 = vector.multi_reduction <add>, %63, %cst_28 [2] : vector<2x8x8xf32> to vector<2x8xf32>
    %65 = vector.shape_cast %64 : vector<2x8xf32> to vector<2x8x1xf32>
    %66 = tpu.reciprocal %65 {approx = true} : vector<2x8x1xf32> -> vector<2x8x1xf32>
    %67 = vector.broadcast %66 : vector<2x8x1xf32> to vector<2x8x8xf32>
    %68 = arith.mulf %63, %67 : vector<2x8x8xf32>
    %69 = arith.truncf %68 : vector<2x8x8xf32> to vector<2x8x8xbf16>
    "tpu.trace_start"() <{level = 10 : i32, message = "nts,nsd->ntd"}> : () -> ()
    %cst_29 = arith.constant dense<0.000000e+00> : vector<2x8x16xf32>
    %70 = tpu.matmul %69, %57, %cst_29 {dimension_numbers = #tpu.dot_dimension_numbers<[2], [1], [1], [2], [0, 0, 0, 1, 1, 2], [0], [0]>} : vector<2x8x8xbf16>, vector<2x8x16xbf16>, vector<2x8x16xf32> -> vector<2x8x16xf32>
    "tpu.trace_stop"() : () -> ()
    %71 = vector.shape_cast %70 : vector<2x8x16xf32> to vector<16x16xf32>
    %72 = arith.truncf %71 : vector<16x16xf32> to vector<16x16xbf16>
    %c16 = arith.constant 16 : index
    %c128_30 = arith.constant 128 : index
    %73 = vector.load %arg1[%c16, %c128_30] : memref<32x512xbf16, #tpu.memory_space<vmem>>, vector<16x32xbf16>
    %cst_31 = arith.constant dense<0.000000e+00> : vector<16x32xf32>
    %74 = tpu.matmul %72, %73, %cst_31 {dimension_numbers = #tpu.dot_dimension_numbers<[1], [0], [0], [1], [0, 0, 1, 1], [], []>} : vector<16x16xbf16>, vector<16x32xbf16>, vector<16x32xf32> -> vector<16x32xf32>
    %cst_32 = arith.constant 0.000000e+00 : f32
    %75 = vector.broadcast %cst_32 : f32 to vector<16x32xf32>
    %76 = arith.addf %75, %51 : vector<16x32xf32>
    %77 = arith.addf %76, %74 : vector<16x32xf32>
    %78 = vector.broadcast %2 : vector<1x32xf32> to vector<16x32xf32>
    %79 = arith.addf %77, %78 : vector<16x32xf32>
    %80 = arith.addf %22, %79 : vector<16x32xf32>
    %cst_33 = arith.constant dense<0.000000e+00> : vector<16xf32>
    %81 = vector.multi_reduction <add>, %80, %cst_33 [1] : vector<16x32xf32> to vector<16xf32>
    %82 = vector.shape_cast %81 : vector<16xf32> to vector<16x1xf32>
    %cst_34 = arith.constant 3.200000e+01 : f32
    %83 = vector.broadcast %cst_34 : f32 to vector<16x1xf32>
    %84 = arith.divf %82, %83 : vector<16x1xf32>
    %85 = arith.mulf %80, %80 : vector<16x32xf32>
    %cst_35 = arith.constant dense<0.000000e+00> : vector<16xf32>
    %86 = vector.multi_reduction <add>, %85, %cst_35 [1] : vector<16x32xf32> to vector<16xf32>
    %87 = vector.shape_cast %86 : vector<16xf32> to vector<16x1xf32>
    %cst_36 = arith.constant 3.200000e+01 : f32
    %88 = vector.broadcast %cst_36 : f32 to vector<16x1xf32>
    %89 = arith.divf %87, %88 : vector<16x1xf32>
    %90 = arith.mulf %84, %84 : vector<16x1xf32>
    %91 = arith.subf %89, %90 : vector<16x1xf32>
    %92 = vector.broadcast %84 : vector<16x1xf32> to vector<16x32xf32>
    %93 = arith.subf %80, %92 : vector<16x32xf32>
    %cst_37 = arith.constant 9.99999974E-6 : f32
    %94 = vector.broadcast %cst_37 : f32 to vector<16x1xf32>
    %95 = arith.addf %91, %94 : vector<16x1xf32>
    %96 = math.rsqrt %95 : vector<16x1xf32>
    %97 = vector.broadcast %96 : vector<16x1xf32> to vector<16x32xf32>
    %98 = arith.mulf %93, %97 : vector<16x32xf32>
    %99 = vector.broadcast %5 : vector<1x32xf32> to vector<16x32xf32>
    %100 = arith.mulf %98, %99 : vector<16x32xf32>
    %101 = vector.broadcast %6 : vector<1x32xf32> to vector<16x32xf32>
    %102 = arith.addf %100, %101 : vector<16x32xf32>
    %103 = arith.truncf %102 : vector<16x32xf32> to vector<16x32xbf16>
    %c0_38 = arith.constant 0 : index
    %c256 = arith.constant 256 : index
    %104 = vector.load %arg1[%c0_38, %c256] : memref<32x512xbf16, #tpu.memory_space<vmem>>, vector<32x64xbf16>
    %cst_39 = arith.constant dense<0.000000e+00> : vector<16x64xf32>
    %105 = tpu.matmul %103, %104, %cst_39 {dimension_numbers = #tpu.dot_dimension_numbers<[1], [0], [0], [1], [0, 0, 1, 1], [], []>} : vector<16x32xbf16>, vector<32x64xbf16>, vector<16x64xf32> -> vector<16x64xf32>
    %106 = vector.broadcast %3 : vector<1x64xf32> to vector<16x64xf32>
    %107 = arith.addf %105, %106 : vector<16x64xf32>
    %cst_40 = arith.constant 0.000000e+00 : f32
    %108 = vector.broadcast %cst_40 : f32 to vector<16x64xf32>
    %109 = arith.maximumf %107, %108 : vector<16x64xf32>
    %110 = arith.truncf %109 : vector<16x64xf32> to vector<16x64xbf16>
    %c0_41 = arith.constant 0 : index
    %c0_42 = arith.constant 0 : index
    %111 = vector.load %arg2[%c0_41, %c0_42] : memref<64x32xbf16, #tpu.memory_space<vmem>>, vector<64x32xbf16>
    %cst_43 = arith.constant dense<0.000000e+00> : vector<16x32xf32>
    %112 = tpu.matmul %110, %111, %cst_43 {dimension_numbers = #tpu.dot_dimension_numbers<[1], [0], [0], [1], [0, 0, 1, 1], [], []>} : vector<16x64xbf16>, vector<64x32xbf16>, vector<16x32xf32> -> vector<16x32xf32>
    %113 = vector.broadcast %4 : vector<1x32xf32> to vector<16x32xf32>
    %114 = arith.addf %112, %113 : vector<16x32xf32>
    %115 = arith.addf %102, %114 : vector<16x32xf32>
    %cst_44 = arith.constant dense<0.000000e+00> : vector<16xf32>
    %116 = vector.multi_reduction <add>, %115, %cst_44 [1] : vector<16x32xf32> to vector<16xf32>
    %117 = vector.shape_cast %116 : vector<16xf32> to vector<16x1xf32>
    %cst_45 = arith.constant 3.200000e+01 : f32
    %118 = vector.broadcast %cst_45 : f32 to vector<16x1xf32>
    %119 = arith.divf %117, %118 : vector<16x1xf32>
    %120 = arith.mulf %115, %115 : vector<16x32xf32>
    %cst_46 = arith.constant dense<0.000000e+00> : vector<16xf32>
    %121 = vector.multi_reduction <add>, %120, %cst_46 [1] : vector<16x32xf32> to vector<16xf32>
    %122 = vector.shape_cast %121 : vector<16xf32> to vector<16x1xf32>
    %cst_47 = arith.constant 3.200000e+01 : f32
    %123 = vector.broadcast %cst_47 : f32 to vector<16x1xf32>
    %124 = arith.divf %122, %123 : vector<16x1xf32>
    %125 = arith.mulf %119, %119 : vector<16x1xf32>
    %126 = arith.subf %124, %125 : vector<16x1xf32>
    %127 = vector.broadcast %119 : vector<16x1xf32> to vector<16x32xf32>
    %128 = arith.subf %115, %127 : vector<16x32xf32>
    %cst_48 = arith.constant 9.99999974E-6 : f32
    %129 = vector.broadcast %cst_48 : f32 to vector<16x1xf32>
    %130 = arith.addf %126, %129 : vector<16x1xf32>
    %131 = math.rsqrt %130 : vector<16x1xf32>
    %132 = vector.broadcast %131 : vector<16x1xf32> to vector<16x32xf32>
    %133 = arith.mulf %128, %132 : vector<16x32xf32>
    %134 = vector.broadcast %7 : vector<1x32xf32> to vector<16x32xf32>
    %135 = arith.mulf %133, %134 : vector<16x32xf32>
    %136 = vector.broadcast %8 : vector<1x32xf32> to vector<16x32xf32>
    %137 = arith.addf %135, %136 : vector<16x32xf32>
    %cst_49 = arith.constant dense<0.000000e+00> : vector<16xf32>
    %138 = vector.multi_reduction <add>, %137, %cst_49 [1] : vector<16x32xf32> to vector<16xf32>
    %139 = vector.shape_cast %138 : vector<16xf32> to vector<16x1xf32>
    %cst_50 = arith.constant 3.200000e+01 : f32
    %140 = vector.broadcast %cst_50 : f32 to vector<16x1xf32>
    %141 = arith.divf %139, %140 : vector<16x1xf32>
    %142 = arith.mulf %137, %137 : vector<16x32xf32>
    %cst_51 = arith.constant dense<0.000000e+00> : vector<16xf32>
    %143 = vector.multi_reduction <add>, %142, %cst_51 [1] : vector<16x32xf32> to vector<16xf32>
    %144 = vector.shape_cast %143 : vector<16xf32> to vector<16x1xf32>
    %cst_52 = arith.constant 3.200000e+01 : f32
    %145 = vector.broadcast %cst_52 : f32 to vector<16x1xf32>
    %146 = arith.divf %144, %145 : vector<16x1xf32>
    %147 = arith.mulf %141, %141 : vector<16x1xf32>
    %148 = arith.subf %146, %147 : vector<16x1xf32>
    %149 = vector.broadcast %141 : vector<16x1xf32> to vector<16x32xf32>
    %150 = arith.subf %137, %149 : vector<16x32xf32>
    %cst_53 = arith.constant 9.99999974E-6 : f32
    %151 = vector.broadcast %cst_53 : f32 to vector<16x1xf32>
    %152 = arith.addf %148, %151 : vector<16x1xf32>
    %153 = math.rsqrt %152 : vector<16x1xf32>
    %154 = vector.broadcast %153 : vector<16x1xf32> to vector<16x32xf32>
    %155 = arith.mulf %150, %154 : vector<16x32xf32>
    %156 = vector.broadcast %9 : vector<1x32xf32> to vector<16x32xf32>
    %157 = arith.mulf %155, %156 : vector<16x32xf32>
    %158 = vector.broadcast %10 : vector<1x32xf32> to vector<16x32xf32>
    %159 = arith.addf %157, %158 : vector<16x32xf32>
    %160 = vector.shape_cast %159 : vector<16x32xf32> to vector<2x8x32xf32>
    %cst_54 = arith.constant dense<0.000000e+00> : vector<2x32xf32>
    %161 = vector.multi_reduction <add>, %160, %cst_54 [1] : vector<2x8x32xf32> to vector<2x32xf32>
    %162 = arith.truncf %161 : vector<2x32xf32> to vector<2x32xbf16>
    %c0_55 = arith.constant 0 : index
    %c384 = arith.constant 384 : index
    %163 = vector.load %arg1[%c0_55, %c384] : memref<32x512xbf16, #tpu.memory_space<vmem>>, vector<32x2xbf16>
    %cst_56 = arith.constant dense<0.000000e+00> : vector<2x2xf32>
    %164 = tpu.matmul %162, %163, %cst_56 {dimension_numbers = #tpu.dot_dimension_numbers<[1], [0], [0], [1], [0, 0, 1, 1], [], []>} : vector<2x32xbf16>, vector<32x2xbf16>, vector<2x2xf32> -> vector<2x2xf32>
    %165 = vector.broadcast %11 : vector<1x2xf32> to vector<2x2xf32>
    %166 = arith.addf %164, %165 : vector<2x2xf32>
    %c0_57 = arith.constant 0 : index
    %c0_58 = arith.constant 0 : index
    %167 = vector.load %arg4[%c0_57, %c0_58] : memref<2x2xf32, #tpu.memory_space<vmem>>, vector<2x2xf32>
    tpu.vector_store %arg4[%c0_57, %c0_58], %166 {strides = array<i32>} : memref<2x2xf32, #tpu.memory_space<vmem>>, vector<2x2xf32>,
    return
  }
}

</mosaic_0001>

<llo_original>
// kernel: transformer_classifier.1
$region0: #{transformer_classifier.1}
  #allocation0 [shape = 'u32[]', space=smem, size = 0x4, offset = 0x4, fixed_abs, tag = 'smem constant byte address 0x4 - core index']
  #allocation1 [shape = 'u32[144,128]{1,0:T(1,128)}', space=vmem, size = 0x12000, scoped, tag = 'internal scratch']
  %s0 = inlined_call_operand.vmem [shape: f32[2,4,8], index: 0, kind: input, shape index: {}]
  %s1 = inlined_call_operand.hbm [shape: bf16[32,512], index: 1, kind: input, shape index: {}]
  %s2 = inlined_call_operand.vmem [shape: bf16[64,32], index: 2, kind: input, shape index: {}]
  %s3 = inlined_call_operand.vmem [shape: f32[32,128], index: 3, kind: input, shape index: {}]
  %s4 = inlined_call_operand.hbm [shape: f32[2,2], index: 4, kind: output, shape index: {}]
  %s5 = sld [smem:[#allocation0]]
  $region30: #{transformer_classifier.1} parent=0
    _
  %s7 = ssub.s32 1, %s5
  %s8 = scalar_select 0, %s7, %s5
  $region1: #{transformer_classifier.1} parent=0
    #allocation2 [shape = 'u8[32768]{0}', space=vmem, size = 0x8000, scoped, tag = 'input window, operand 1, single buffered']
    #allocation3 [shape = 's32[1]{0}', space=sflag, size = 0x4, scoped, tag = 'scoped memory for transformer_classifier.1']
    #allocation4 [shape = 's32[1]{0}', space=sflag, size = 0x4, scoped, tag = 'scoped memory for transformer_classifier.1']
    #allocation5 [shape = 'u8[1024]{0}', space=vmem, size = 0x400, scoped, tag = 'output window, operand 0, single buffered']
    %9 = vsyncpa [#allocation3], 0
    %10 = vsyncpa [#allocation4], 0
    // Predicated region
    $region2: #{transformer_classifier.1} parent=1 // pred_check
      _
    $region3: #{transformer_classifier.1} parent=1 // pred_check_branch
      %12 = sbr.rel (0) target = $region5
    $region4: #{transformer_classifier.1} parent=1 // pred_region
      _
    $region5: #{transformer_classifier.1} parent=1 // pred_fallthru
      _
    // Predicated region
    $region6: #{transformer_classifier.1} parent=1 // pred_check
      _
    $region7: #{transformer_classifier.1} parent=1 // pred_check_branch
      %14 = sbr.rel (0) target = $region9
    $region8: #{transformer_classifier.1} parent=1 // pred_region
      %s16 = ssub.s32 1024, 1024
      %17 = vsyncadd [#allocation3], %s16
      %s18 = sshll.u32 [#allocation2], 4
      %s19 = int_to_ptr.vmem [resolvable:$true] %s18
      %24 = dma.hbm_to_vmem [thread:$0]  %s1, 1024, %s19, [#allocation3], 256, 256, 16
    $region9: #{transformer_classifier.1} parent=1 // pred_fallthru
      _
    // Predicated region
    $region10: #{transformer_classifier.1} parent=1 // pred_check
      _
    $region11: #{transformer_classifier.1} parent=1 // pred_check_branch
      %26 = sbr.rel (0) target = $region13
    $region12: #{transformer_classifier.1} parent=1 // pred_region
      _
    $region13: #{transformer_classifier.1} parent=1 // pred_fallthru
      _
    // Predicated region
    $region14: #{transformer_classifier.1} parent=1 // pred_check
      _
    $region15: #{transformer_classifier.1} parent=1 // pred_check_branch
      %28 = sbr.rel (0) target = $region17
    $region16: #{transformer_classifier.1} parent=1 // pred_region
      _
    $region17: #{transformer_classifier.1} parent=1 // pred_fallthru
      _
    // Predicated region
    $region18: #{transformer_classifier.1} parent=1 // pred_check
      _
    $region19: #{transformer_classifier.1} parent=1 // pred_check_branch
      %30 = sbr.rel (0) target = $region21
    $region20: #{transformer_classifier.1} parent=1 // pred_region
      %31 = dma.done [#allocation3], 1024
    $region21: #{transformer_classifier.1} parent=1 // pred_fallthru
      _
    %v33 = vld [vmem:[%s3] sm:$0x1]
    %v34 = vld [vmem:[%s3 + $0x1] sm:$0x1]
    %v35 = vld [vmem:[%s3 + $0x2] sm:$0x1]
    %v36 = vld [vmem:[%s3 + $0x3] sm:$0x1]
    %v37 = vld [vmem:[%s3 + $0x4] sm:$0x1]
    %v38 = vld [vmem:[%s3 + $0x5] sm:$0x1]
    %v39 = vld [vmem:[%s3 + $0x6] sm:$0x1]
    %v40 = vld [vmem:[%s3 + $0x7] sm:$0x1]
    %v41 = vld [vmem:[%s3 + $0x8] sm:$0x1]
    %v42 = vld [vmem:[%s3 + $0x9] sm:$0x1]
    %v43 = vld [vmem:[%s3 + $0xa] sm:$0x1]
    %v44 = vld [vmem:[%s3 + $0xb] sm:$0x1]
    %v45 = vld [vmem:[%s3 + $0xc] sm:$0xff]
    %v46 = vld [vmem:[%s3 + $0x14] sm:$0xff]
    %v47 = vld [vmem:[%s3 + $0x1c] sm:$0xf]
    %v48 = vld [vmem:[%s0] sm:$0xf]
    %v49 = vld [vmem:[%s0 + $0x4] sm:$0xf]
    %50 = vxpose.xlu0.b32.start [1/16] %v48, 128
    %51 = vxpose.xlu0.b32.cont [2/16] 0.0, 128
    %52 = vxpose.xlu0.b32.cont [3/16] 0.0, 128
    %53 = vxpose.xlu0.b32.cont [4/16] 0.0, 128
    %54 = vxpose.xlu0.b32.cont [5/16] 0.0, 128
    %55 = vxpose.xlu0.b32.cont [6/16] 0.0, 128
    %56 = vxpose.xlu0.b32.cont [7/16] 0.0, 128
    %57 = vxpose.xlu0.b32.cont [8/16] 0.0, 128
    %58 = vxpose.xlu0.b32.cont [9/16] 0.0, 128
    %59 = vxpose.xlu0.b32.cont [10/16] 0.0, 128
    %60 = vxpose.xlu0.b32.cont [11/16] 0.0, 128
    %61 = vxpose.xlu0.b32.cont [12/16] 0.0, 128
    %62 = vxpose.xlu0.b32.cont [13/16] 0.0, 128
    %63 = vxpose.xlu0.b32.cont [14/16] 0.0, 128
    %64 = vxpose.xlu0.b32.cont [15/16] 0.0, 128
    %65 = vxpose.xlu0.b32.end [16/16] 0.0, 128
    %v66 = vpop.trf.xlu0
    %v67 = vpop.trf.xlu0
    %v68 = vpop.trf.xlu0
    %v69 = vpop.trf.xlu0
    %v70 = vpop.trf.xlu0
    %v71 = vpop.trf.xlu0
    %v72 = vpop.trf.xlu0
    %v73 = vpop.trf.xlu0
    %v74 = vpop.trf.xlu0
    %v75 = vpop.trf.xlu0
    %v76 = vpop.trf.xlu0
    %v77 = vpop.trf.xlu0
    %v78 = vpop.trf.xlu0
    %v79 = vpop.trf.xlu0
    %v80 = vpop.trf.xlu0
    %v81 = vpop.trf.xlu0
    %vm82 = vcmask 31744
    %v84 = vsel %vm82, %v66, 0
    %vm86 = vcmask 1043456
    %v88 = vsel %vm86, %v47, 0
    %90 = vmatprep.subr.mxu0 0.0
    %91 = vmatpush1.msra.mxu0 %v88
    %92 = vmatprep.subr.mxu0 0.0
    %93 = vmatpush1.msra.mxu0 0.0
    %94 = vmatprep.subr.mxu0 0.0
    %95 = vmatpush1.msra.mxu0 0.0
    %96 = vmatprep.subr.mxu0 0.0
    %97 = vmatpush1.msra.mxu0 0.0
    %98 = vmatprep.subr.mxu0 0.0
    %99 = vmatpush1.msra.mxu0 0.0
    %100 = vmatprep.subr.mxu0 0.0
    %101 = vmatpush1.msra.mxu0 0.0
    %102 = vmatprep.subr.mxu0 0.0
    %103 = vmatpush1.msra.mxu0 0.0
    %104 = vmatprep.subr.mxu0 0.0
    %105 = vmatpush1.msra.mxu0 0.0
    %106 = vmatprep.subr.mxu0 0.0
    %107 = vmatpush1.msra.mxu0 0.0
    %108 = vmatprep.subr.mxu0 0.0
    %109 = vmatpush1.msra.mxu0 0.0
    %110 = vmatprep.subr.mxu0 0.0
    %111 = vmatpush1.msra.mxu0 0.0
    %112 = vmatprep.subr.mxu0 0.0
    %113 = vmatpush1.msra.mxu0 0.0
    %114 = vmatprep.subr.mxu0 0.0
    %115 = vmatpush1.msra.mxu0 0.0
    %116 = vmatprep.subr.mxu0 0.0
    %117 = vmatpush1.msra.mxu0 0.0
    %118 = vmatprep.subr.mxu0 0.0
    %119 = vmatpush1.msra.mxu0 0.0
    %120 = vmatprep.subr.mxu0 0.0
    %121 = vmatpush1.msra.mxu0 0.0
    %122 = vmatprep.subr.mxu0 0.0
    %123 = vmatpush1.msra.mxu0 0.0
    %124 = vmatprep.subr.mxu0 0.0
    %125 = vmatpush1.msra.mxu0 0.0
    %126 = vmatprep.subr.mxu0 0.0
    %127 = vmatpush1.msra.mxu0 0.0
    %128 = vmatprep.subr.mxu0 0.0
    %129 = vmatpush1.msra.mxu0 0.0
    %130 = vmatprep.subr.mxu0 0.0
    %131 = vmatpush1.msra.mxu0 0.0
    %132 = vmatprep.subr.mxu0 0.0
    %133 = vmatpush1.msra.mxu0 0.0
    %134 = vmatprep.subr.mxu0 0.0
    %135 = vmatpush1.msra.mxu0 0.0
    %136 = vmatprep.subr.mxu0 0.0
    %137 = vmatpush1.msra.mxu0 0.0
    %138 = vmatprep.subr.mxu0 0.0
    %139 = vmatpush1.msra.mxu0 0.0
    %140 = vmatprep.subr.mxu0 0.0
    %141 = vmatpush1.msra.mxu0 0.0
    %142 = vmatprep.subr.mxu0 0.0
    %143 = vmatpush1.msra.mxu0 0.0
    %144 = vmatprep.subr.mxu0 0.0
    %145 = vmatpush1.msra.mxu0 0.0
    %146 = vmatprep.subr.mxu0 0.0
    %147 = vmatpush1.msra.mxu0 0.0
    %148 = vmatprep.subr.mxu0 0.0
    %149 = vmatpush1.msra.mxu0 0.0
    %150 = vmatprep.subr.mxu0 0.0
    %151 = vmatpush1.msra.mxu0 0.0
    %152 = vmatprep.subr.mxu0 0.0
    %153 = vmatpush1.msra.mxu0 0.0
    %154 = vmatprep.mubr.f32.mxu0 0.0
    %155 = vmatmul.mubr.f32.gmra.mrb[0].mxu0 %v84
    %v156 = vpop.f32.mrb[0].mxu0
    %v157 = vadd.f32 0.0, %v156
    %v158 = vpop.f32.mrb[0].mxu0
    %159 = vdwg.mxu0
    %160 = vxpose.xlu0.b32.start [1/16] %v49, 128
    %161 = vxpose.xlu0.b32.cont [2/16] 0.0, 128
    %162 = vxpose.xlu0.b32.cont [3/16] 0.0, 128
    %163 = vxpose.xlu0.b32.cont [4/16] 0.0, 128
    %164 = vxpose.xlu0.b32.cont [5/16] 0.0, 128
    %165 = vxpose.xlu0.b32.cont [6/16] 0.0, 128
    %166 = vxpose.xlu0.b32.cont [7/16] 0.0, 128
    %167 = vxpose.xlu0.b32.cont [8/16] 0.0, 128
    %168 = vxpose.xlu0.b32.cont [9/16] 0.0, 128
    %169 = vxpose.xlu0.b32.cont [10/16] 0.0, 128
    %170 = vxpose.xlu0.b32.cont [11/16] 0.0, 128
    %171 = vxpose.xlu0.b32.cont [12/16] 0.0, 128
    %172 = vxpose.xlu0.b32.cont [13/16] 0.0, 128
    %173 = vxpose.xlu0.b32.cont [14/16] 0.0, 128
    %174 = vxpose.xlu0.b32.cont [15/16] 0.0, 128
    %175 = vxpose.xlu0.b32.end [16/16] 0.0, 128
    %v176 = vpop.trf.xlu0
    %v177 = vpop.trf.xlu0
    %v178 = vpop.trf.xlu0
    %v179 = vpop.trf.xlu0
    %v180 = vpop.trf.xlu0
    %v181 = vpop.trf.xlu0
    %v182 = vpop.trf.xlu0
    %v183 = vpop.trf.xlu0
    %v184 = vpop.trf.xlu0
    %v185 = vpop.trf.xlu0
    %v186 = vpop.trf.xlu0
    %v187 = vpop.trf.xlu0
    %v188 = vpop.trf.xlu0
    %v189 = vpop.trf.xlu0
    %v190 = vpop.trf.xlu0
    %v191 = vpop.trf.xlu0
    %v193 = vsel %vm82, %v176, 0
    %195 = vmatprep.subr.mxu0 0.0
    %196 = vmatpush1.msra.mxu0 %v88
    %197 = vmatprep.subr.mxu0 0.0
    %198 = vmatpush1.msra.mxu0 0.0
    %199 = vmatprep.subr.mxu0 0.0
    %200 = vmatpush1.msra.mxu0 0.0
    %201 = vmatprep.subr.mxu0 0.0
    %202 = vmatpush1.msra.mxu0 0.0
    %203 = vmatprep.subr.mxu0 0.0
    %204 = vmatpush1.msra.mxu0 0.0
    %205 = vmatprep.subr.mxu0 0.0
    %206 = vmatpush1.msra.mxu0 0.0
    %207 = vmatprep.subr.mxu0 0.0
    %208 = vmatpush1.msra.mxu0 0.0
    %209 = vmatprep.subr.mxu0 0.0
    %210 = vmatpush1.msra.mxu0 0.0
    %211 = vmatprep.subr.mxu0 0.0
    %212 = vmatpush1.msra.mxu0 0.0
    %213 = vmatprep.subr.mxu0 0.0
    %214 = vmatpush1.msra.mxu0 0.0
    %215 = vmatprep.subr.mxu0 0.0
    %216 = vmatpush1.msra.mxu0 0.0
    %217 = vmatprep.subr.mxu0 0.0
    %218 = vmatpush1.msra.mxu0 0.0
    %219 = vmatprep.subr.mxu0 0.0
    %220 = vmatpush1.msra.mxu0 0.0
    %221 = vmatprep.subr.mxu0 0.0
    %222 = vmatpush1.msra.mxu0 0.0
    %223 = vmatprep.subr.mxu0 0.0
    %224 = vmatpush1.msra.mxu0 0.0
    %225 = vmatprep.subr.mxu0 0.0
    %226 = vmatpush1.msra.mxu0 0.0
    %227 = vmatprep.subr.mxu0 0.0
    %228 = vmatpush1.msra.mxu0 0.0
    %229 = vmatprep.subr.mxu0 0.0
    %230 = vmatpush1.msra.mxu0 0.0
    %231 = vmatprep.subr.mxu0 0.0
    %232 = vmatpush1.msra.mxu0 0.0
    %233 = vmatprep.subr.mxu0 0.0
    %234 = vmatpush1.msra.mxu0 0.0
    %235 = vmatprep.subr.mxu0 0.0
    %236 = vmatpush1.msra.mxu0 0.0
    %237 = vmatprep.subr.mxu0 0.0
    %238 = vmatpush1.msra.mxu0 0.0
    %239 = vmatprep.subr.mxu0 0.0
    %240 = vmatpush1.msra.mxu0 0.0
    %241 = vmatprep.subr.mxu0 0.0
    %242 = vmatpush1.msra.mxu0 0.0
    %243 = vmatprep.subr.mxu0 0.0
    %244 = vmatpush1.msra.mxu0 0.0
    %245 = vmatprep.subr.mxu0 0.0
    %246 = vmatpush1.msra.mxu0 0.0
    %247 = vmatprep.subr.mxu0 0.0
    %248 = vmatpush1.msra.mxu0 0.0
    %249 = vmatprep.subr.mxu0 0.0
    %250 = vmatpush1.msra.mxu0 0.0
    %251 = vmatprep.subr.mxu0 0.0
    %252 = vmatpush1.msra.mxu0 0.0
    %253 = vmatprep.subr.mxu0 0.0
    %254 = vmatpush1.msra.mxu0 0.0
    %255 = vmatprep.subr.mxu0 0.0
    %256 = vmatpush1.msra.mxu0 0.0
    %257 = vmatprep.subr.mxu0 0.0
    %258 = vmatpush1.msra.mxu0 0.0
    %259 = vmatprep.mubr.f32.mxu0 0.0
    %260 = vmatmul.mubr.f32.gmra.mrb[0].mxu0 %v193
    %v261 = vpop.f32.mrb[0].mxu0
    %v262 = vadd.f32 0.0, %v261
    %v263 = vpop.f32.mrb[0].mxu0
    %264 = vdwg.mxu0
    %v265 = vlaneseq
    %v266 = vshrl.u32 %v265, 7
    %v267 = vsub.s32 0, %v266
    %v268 = vrot.slane %v34, %v267
    %v269 = vadd.f32 %v157, %v268
    %v270 = vadd.f32 %v262, %v268
    %v271 = vadd.f32 %v269, %v45
    %v272 = vadd.f32 %v270, %v46
    %v273 = vpack.c.bf16 %v272, %v271
    %v274 = vld [vmem:[#allocation2] sm:$0xf]
    %v275 = vld [vmem:[#allocation2 + $0x10] sm:$0xf]
    %v276 = vld [vmem:[#allocation2 + $0x20] sm:$0xf]
    %v277 = vld [vmem:[#allocation2 + $0x30] sm:$0xf]
    %v278 = vlaneseq
    %v279 = vshrl.u32 %v278, 7
    %v280 = vsub.s32 0, %v279
    %v281 = vrot.slane %v33, %v280
    %v286 = vunpack.c.l.b16 %v274
    %v287 = vunpack.c.l.b16 %v275
    %v288 = vunpack.c.l.b16 %v276
    %v289 = vunpack.c.l.b16 %v277
    %v290 = vpack.c.b16 %v287, %v286
    %v291 = vpack.c.b16 %v289, %v288
    %vm294 = vcmask 261120
    %v296 = vsel %vm294, %v273, 0
    %298 = vmatprep.subr.bf16.mxu0 0
    %299 = vmatpush1.bf16.msra.mxu0 %v290
    %300 = vmatprep.subr.bf16.mxu0 0
    %301 = vmatpush1.bf16.msra.mxu0 %v291
    %302 = vmatprep.subr.bf16.mxu0 0
    %303 = vmatpush1.bf16.msra.mxu0 0
    %304 = vmatprep.subr.bf16.mxu0 0
    %305 = vmatpush1.bf16.msra.mxu0 0
    %306 = vmatprep.subr.bf16.mxu0 0
    %307 = vmatpush1.bf16.msra.mxu0 0
    %308 = vmatprep.subr.bf16.mxu0 0
    %309 = vmatpush1.bf16.msra.mxu0 0
    %310 = vmatprep.subr.bf16.mxu0 0
    %311 = vmatpush1.bf16.msra.mxu0 0
    %312 = vmatprep.subr.bf16.mxu0 0
    %313 = vmatpush1.bf16.msra.mxu0 0
    %314 = vmatprep.subr.bf16.mxu0 0
    %315 = vmatpush1.bf16.msra.mxu0 0
    %316 = vmatprep.subr.bf16.mxu0 0
    %317 = vmatpush1.bf16.msra.mxu0 0
    %318 = vmatprep.subr.bf16.mxu0 0
    %319 = vmatpush1.bf16.msra.mxu0 0
    %320 = vmatprep.subr.bf16.mxu0 0
    %321 = vmatpush1.bf16.msra.mxu0 0
    %322 = vmatprep.subr.bf16.mxu0 0
    %323 = vmatpush1.bf16.msra.mxu0 0
    %324 = vmatprep.subr.bf16.mxu0 0
    %325 = vmatpush1.bf16.msra.mxu0 0
    %326 = vmatprep.subr.bf16.mxu0 0
    %327 = vmatpush1.bf16.msra.mxu0 0
    %328 = vmatprep.subr.bf16.mxu0 0
    %329 = vmatpush1.bf16.msra.mxu0 0
    %330 = vmatprep.mubr.bf16.mxu0 0
    %331 = vmatmul.mubr.bf16.gmra.mrb[0].mxu0 %v296
    %v332 = vpop.f32.mrb[0].mxu0
    %v333 = vadd.f32 %v281, %v332
    %v334 = vpop.f32.mrb[0].mxu0
    %v335 = vpop.f32.mrb[0].mxu0
    %v336 = vadd.f32 %v281, %v335
    %v337 = vpop.f32.mrb[0].mxu0
    %338 = vdwg.mxu0
    %v339 = vpack.c.bf16 %v333, %v333
    %v340 = vpack.c.bf16 %v336, %v336
    %342 = vrot.lane.b32.xlu0 %v339, 96
    %v343 = vpop.permute.xlu0 %342
    %vm344 = vcmask 130048
    %v346 = vsel %vm344, %v339, 0
    %v349 = vsel %vm344, %v343, 0
    %351 = vmatprep.subr.bf16.mxu0 0
    %352 = vmatpush1.bf16.xpose.msra.mxu0 %v349
    %353 = vmatprep.subr.bf16.mxu0 0
    %354 = vmatpush1.bf16.xpose.msra.mxu0 0
    %355 = vmatprep.subr.bf16.mxu0 0
    %356 = vmatpush1.bf16.xpose.msra.mxu0 0
    %357 = vmatprep.subr.bf16.mxu0 0
    %358 = vmatpush1.bf16.xpose.msra.mxu0 0
    %359 = vmatprep.subr.bf16.mxu0 0
    %360 = vmatpush1.bf16.xpose.msra.mxu0 0
    %361 = vmatprep.subr.bf16.mxu0 0
    %362 = vmatpush1.bf16.xpose.msra.mxu0 0
    %363 = vmatprep.subr.bf16.mxu0 0
    %364 = vmatpush1.bf16.xpose.msra.mxu0 0
    %365 = vmatprep.subr.bf16.mxu0 0
    %366 = vmatpush1.bf16.xpose.msra.mxu0 0
    %367 = vmatprep.subr.bf16.mxu0 0
    %368 = vmatpush1.bf16.xpose.msra.mxu0 0
    %369 = vmatprep.subr.bf16.mxu0 0
    %370 = vmatpush1.bf16.xpose.msra.mxu0 0
    %371 = vmatprep.subr.bf16.mxu0 0
    %372 = vmatpush1.bf16.xpose.msra.mxu0 0
    %373 = vmatprep.subr.bf16.mxu0 0
    %374 = vmatpush1.bf16.xpose.msra.mxu0 0
    %375 = vmatprep.subr.bf16.mxu0 0
    %376 = vmatpush1.bf16.xpose.msra.mxu0 0
    %377 = vmatprep.subr.bf16.mxu0 0
    %378 = vmatpush1.bf16.xpose.msra.mxu0 0
    %379 = vmatprep.subr.bf16.mxu0 0
    %380 = vmatpush1.bf16.xpose.msra.mxu0 0
    %381 = vmatprep.subr.bf16.mxu0 0
    %382 = vmatpush1.bf16.xpose.msra.mxu0 0
    %383 = vmatprep.mubr.bf16.mxu0 0
    %384 = vmatmul.mubr.bf16.gmra.mrb[0].mxu0 %v346
    %v385 = vpop.f32.mrb[0].mxu0
    %v386 = vadd.f32 0.0, %v385
    %v387 = vpop.f32.mrb[0].mxu0
    %v388 = vpop.f32.mrb[0].mxu0
    %v389 = vpop.f32.mrb[0].mxu0
    %390 = vdwg.mxu0
    %392 = vrot.lane.b32.xlu0 %v340, 96
    %v393 = vpop.permute.xlu0 %392
    %v395 = vsel %vm344, %v340, 0
    %v398 = vsel %vm344, %v393, 0
    %400 = vmatprep.subr.bf16.mxu0 0
    %401 = vmatpush1.bf16.xpose.msra.mxu0 %v398
    %402 = vmatprep.subr.bf16.mxu0 0
    %403 = vmatpush1.bf16.xpose.msra.mxu0 0
    %404 = vmatprep.subr.bf16.mxu0 0
    %405 = vmatpush1.bf16.xpose.msra.mxu0 0
    %406 = vmatprep.subr.bf16.mxu0 0
    %407 = vmatpush1.bf16.xpose.msra.mxu0 0
    %408 = vmatprep.subr.bf16.mxu0 0
    %409 = vmatpush1.bf16.xpose.msra.mxu0 0
    %410 = vmatprep.subr.bf16.mxu0 0
    %411 = vmatpush1.bf16.xpose.msra.mxu0 0
    %412 = vmatprep.subr.bf16.mxu0 0
    %413 = vmatpush1.bf16.xpose.msra.mxu0 0
    %414 = vmatprep.subr.bf16.mxu0 0
    %415 = vmatpush1.bf16.xpose.msra.mxu0 0
    %416 = vmatprep.subr.bf16.mxu0 0
    %417 = vmatpush1.bf16.xpose.msra.mxu0 0
    %418 = vmatprep.subr.bf16.mxu0 0
    %419 = vmatpush1.bf16.xpose.msra.mxu0 0
    %420 = vmatprep.subr.bf16.mxu0 0
    %421 = vmatpush1.bf16.xpose.msra.mxu0 0
    %422 = vmatprep.subr.bf16.mxu0 0
    %423 = vmatpush1.bf16.xpose.msra.mxu0 0
    %424 = vmatprep.subr.bf16.mxu0 0
    %425 = vmatpush1.bf16.xpose.msra.mxu0 0
    %426 = vmatprep.subr.bf16.mxu0 0
    %427 = vmatpush1.bf16.xpose.msra.mxu0 0
    %428 = vmatprep.subr.bf16.mxu0 0
    %429 = vmatpush1.bf16.xpose.msra.mxu0 0
    %430 = vmatprep.subr.bf16.mxu0 0
    %431 = vmatpush1.bf16.xpose.msra.mxu0 0
    %432 = vmatprep.mubr.bf16.mxu0 0
    %433 = vmatmul.mubr.bf16.gmra.mrb[0].mxu0 %v395
    %v434 = vpop.f32.mrb[0].mxu0
    %v435 = vadd.f32 0.0, %v434
    %v436 = vpop.f32.mrb[0].mxu0
    %v437 = vpop.f32.mrb[0].mxu0
    %v438 = vpop.f32.mrb[0].mxu0
    %439 = vdwg.mxu0
    %vm440 = vcmask 64512
    %v441 = vsel %vm440, %v386, -inf
    %442 = vmax.xlane.f32.xlu0 %v441
    %v443 = vpop.xlane.xlu0 %442
    %v444 = vsel %vm440, %v435, -inf
    %445 = vmax.xlane.f32.xlu0 %v444
    %v446 = vpop.xlane.xlu0 %445
    %v447 = vsub.f32 %v386, %v443
    %v448 = vsub.f32 %v435, %v446
    %v449 = vmul.f32 %v447, 1.442695
    %v450 = vpow.pop %v449
    %v451 = vmul.f32 %v448, 1.442695
    %v452 = vpow.pop %v451
    %v453 = vsel %vm440, %v450, 0.0
    %454 = vadd.xlane.f32.xlu0 %v453
    %v455 = vpop.xlane.xlu0 %454
    %v456 = vsel %vm440, %v452, 0.0
    %457 = vadd.xlane.f32.xlu0 %v456
    %v458 = vpop.xlane.xlu0 %457
    %v459 = vrcp.pop %v455
    %v460 = vrcp.pop %v458
    %v461 = vmul.f32 %v450, %v459
    %v462 = vmul.f32 %v452, %v460
    %v463 = vpack.c.bf16 %v461, %v461
    %v464 = vpack.c.bf16 %v462, %v462
    %465 = vrot.lane.b32.xlu0 %v339, 64
    %v466 = vpop.permute.xlu0 %465
    %v468 = vsel %vm440, %v463, 0
    %v471 = vsel %vm86, %v466, 0
    %473 = vmatprep.subr.bf16.mxu0 0
    %474 = vmatpush1.bf16.msra.mxu0 %v471
    %475 = vmatprep.subr.bf16.mxu0 0
    %476 = vmatpush1.bf16.msra.mxu0 0
    %477 = vmatprep.subr.bf16.mxu0 0
    %478 = vmatpush1.bf16.msra.mxu0 0
    %479 = vmatprep.subr.bf16.mxu0 0
    %480 = vmatpush1.bf16.msra.mxu0 0
    %481 = vmatprep.subr.bf16.mxu0 0
    %482 = vmatpush1.bf16.msra.mxu0 0
    %483 = vmatprep.subr.bf16.mxu0 0
    %484 = vmatpush1.bf16.msra.mxu0 0
    %485 = vmatprep.subr.bf16.mxu0 0
    %486 = vmatpush1.bf16.msra.mxu0 0
    %487 = vmatprep.subr.bf16.mxu0 0
    %488 = vmatpush1.bf16.msra.mxu0 0
    %489 = vmatprep.subr.bf16.mxu0 0
    %490 = vmatpush1.bf16.msra.mxu0 0
    %491 = vmatprep.subr.bf16.mxu0 0
    %492 = vmatpush1.bf16.msra.mxu0 0
    %493 = vmatprep.subr.bf16.mxu0 0
    %494 = vmatpush1.bf16.msra.mxu0 0
    %495 = vmatprep.subr.bf16.mxu0 0
    %496 = vmatpush1.bf16.msra.mxu0 0
    %497 = vmatprep.subr.bf16.mxu0 0
    %498 = vmatpush1.bf16.msra.mxu0 0
    %499 = vmatprep.subr.bf16.mxu0 0
    %500 = vmatpush1.bf16.msra.mxu0 0
    %501 = vmatprep.subr.bf16.mxu0 0
    %502 = vmatpush1.bf16.msra.mxu0 0
    %503 = vmatprep.subr.bf16.mxu0 0
    %504 = vmatpush1.bf16.msra.mxu0 0
    %505 = vmatprep.mubr.bf16.mxu0 0
    %506 = vmatmul.mubr.bf16.gmra.mrb[0].mxu0 %v468
    %v507 = vpop.f32.mrb[0].mxu0
    %v508 = vadd.f32 0.0, %v507
    %v509 = vpop.f32.mrb[0].mxu0
    %v510 = vpop.f32.mrb[0].mxu0
    %v511 = vpop.f32.mrb[0].mxu0
    %512 = vdwg.mxu0
    %513 = vrot.lane.b32.xlu0 %v340, 64
    %v514 = vpop.permute.xlu0 %513
    %v516 = vsel %vm440, %v464, 0
    %v519 = vsel %vm86, %v514, 0
    %521 = vmatprep.subr.bf16.mxu0 0
    %522 = vmatpush1.bf16.msra.mxu0 %v519
    %523 = vmatprep.subr.bf16.mxu0 0
    %524 = vmatpush1.bf16.msra.mxu0 0
    %525 = vmatprep.subr.bf16.mxu0 0
    %526 = vmatpush1.bf16.msra.mxu0 0
    %527 = vmatprep.subr.bf16.mxu0 0
    %528 = vmatpush1.bf16.msra.mxu0 0
    %529 = vmatprep.subr.bf16.mxu0 0
    %530 = vmatpush1.bf16.msra.mxu0 0
    %531 = vmatprep.subr.bf16.mxu0 0
    %532 = vmatpush1.bf16.msra.mxu0 0
    %533 = vmatprep.subr.bf16.mxu0 0
    %534 = vmatpush1.bf16.msra.mxu0 0
    %535 = vmatprep.subr.bf16.mxu0 0
    %536 = vmatpush1.bf16.msra.mxu0 0
    %537 = vmatprep.subr.bf16.mxu0 0
    %538 = vmatpush1.bf16.msra.mxu0 0
    %539 = vmatprep.subr.bf16.mxu0 0
    %540 = vmatpush1.bf16.msra.mxu0 0
    %541 = vmatprep.subr.bf16.mxu0 0
    %542 = vmatpush1.bf16.msra.mxu0 0
    %543 = vmatprep.subr.bf16.mxu0 0
    %544 = vmatpush1.bf16.msra.mxu0 0
    %545 = vmatprep.subr.bf16.mxu0 0
    %546 = vmatpush1.bf16.msra.mxu0 0
    %547 = vmatprep.subr.bf16.mxu0 0
    %548 = vmatpush1.bf16.msra.mxu0 0
    %549 = vmatprep.subr.bf16.mxu0 0
    %550 = vmatpush1.bf16.msra.mxu0 0
    %551 = vmatprep.subr.bf16.mxu0 0
    %552 = vmatpush1.bf16.msra.mxu0 0
    %553 = vmatprep.mubr.bf16.mxu0 0
    %554 = vmatmul.mubr.bf16.gmra.mrb[0].mxu0 %v516
    %v555 = vpop.f32.mrb[0].mxu0
    %v556 = vadd.f32 0.0, %v555
    %v557 = vpop.f32.mrb[0].mxu0
    %v558 = vpop.f32.mrb[0].mxu0
    %v559 = vpop.f32.mrb[0].mxu0
    %560 = vdwg.mxu0
    %v561 = vpack.c.bf16 %v556, %v508
    %v562 = vld [vmem:[#allocation2 + $0x4] sm:$0xf]
    %v563 = vld [vmem:[#allocation2 + $0x14] sm:$0xf]
    %564 = vrot.lane.b32.xlu0 %v339, 112
    %v565 = vpop.permute.xlu0 %564
    %566 = vrot.lane.b32.xlu0 %v339, 80
    %v567 = vpop.permute.xlu0 %566
    %v569 = vsel %vm344, %v565, 0
    %v572 = vsel %vm344, %v567, 0
    %574 = vmatprep.subr.bf16.mxu0 0
    %575 = vmatpush1.bf16.xpose.msra.mxu0 %v572
    %576 = vmatprep.subr.bf16.mxu0 0
    %577 = vmatpush1.bf16.xpose.msra.mxu0 0
    %578 = vmatprep.subr.bf16.mxu0 0
    %579 = vmatpush1.bf16.xpose.msra.mxu0 0
    %580 = vmatprep.subr.bf16.mxu0 0
    %581 = vmatpush1.bf16.xpose.msra.mxu0 0
    %582 = vmatprep.subr.bf16.mxu0 0
    %583 = vmatpush1.bf16.xpose.msra.mxu0 0
    %584 = vmatprep.subr.bf16.mxu0 0
    %585 = vmatpush1.bf16.xpose.msra.mxu0 0
    %586 = vmatprep.subr.bf16.mxu0 0
    %587 = vmatpush1.bf16.xpose.msra.mxu0 0
    %588 = vmatprep.subr.bf16.mxu0 0
    %589 = vmatpush1.bf16.xpose.msra.mxu0 0
    %590 = vmatprep.subr.bf16.mxu0 0
    %591 = vmatpush1.bf16.xpose.msra.mxu0 0
    %592 = vmatprep.subr.bf16.mxu0 0
    %593 = vmatpush1.bf16.xpose.msra.mxu0 0
    %594 = vmatprep.subr.bf16.mxu0 0
    %595 = vmatpush1.bf16.xpose.msra.mxu0 0
    %596 = vmatprep.subr.bf16.mxu0 0
    %597 = vmatpush1.bf16.xpose.msra.mxu0 0
    %598 = vmatprep.subr.bf16.mxu0 0
    %599 = vmatpush1.bf16.xpose.msra.mxu0 0
    %600 = vmatprep.subr.bf16.mxu0 0
    %601 = vmatpush1.bf16.xpose.msra.mxu0 0
    %602 = vmatprep.subr.bf16.mxu0 0
    %603 = vmatpush1.bf16.xpose.msra.mxu0 0
    %604 = vmatprep.subr.bf16.mxu0 0
    %605 = vmatpush1.bf16.xpose.msra.mxu0 0
    %606 = vmatprep.mubr.bf16.mxu0 0
    %607 = vmatmul.mubr.bf16.gmra.mrb[0].mxu0 %v569
    %v608 = vpop.f32.mrb[0].mxu0
    %v609 = vadd.f32 0.0, %v608
    %v610 = vpop.f32.mrb[0].mxu0
    %v611 = vpop.f32.mrb[0].mxu0
    %v612 = vpop.f32.mrb[0].mxu0
    %613 = vdwg.mxu0
    %614 = vrot.lane.b32.xlu0 %v340, 112
    %v615 = vpop.permute.xlu0 %614
    %616 = vrot.lane.b32.xlu0 %v340, 80
    %v617 = vpop.permute.xlu0 %616
    %v619 = vsel %vm344, %v615, 0
    %v622 = vsel %vm344, %v617, 0
    %624 = vmatprep.subr.bf16.mxu0 0
    %625 = vmatpush1.bf16.xpose.msra.mxu0 %v622
    %626 = vmatprep.subr.bf16.mxu0 0
    %627 = vmatpush1.bf16.xpose.msra.mxu0 0
    %628 = vmatprep.subr.bf16.mxu0 0
    %629 = vmatpush1.bf16.xpose.msra.mxu0 0
    %630 = vmatprep.subr.bf16.mxu0 0
    %631 = vmatpush1.bf16.xpose.msra.mxu0 0
    %632 = vmatprep.subr.bf16.mxu0 0
    %633 = vmatpush1.bf16.xpose.msra.mxu0 0
    %634 = vmatprep.subr.bf16.mxu0 0
    %635 = vmatpush1.bf16.xpose.msra.mxu0 0
    %636 = vmatprep.subr.bf16.mxu0 0
    %637 = vmatpush1.bf16.xpose.msra.mxu0 0
    %638 = vmatprep.subr.bf16.mxu0 0
    %639 = vmatpush1.bf16.xpose.msra.mxu0 0
    %640 = vmatprep.subr.bf16.mxu0 0
    %641 = vmatpush1.bf16.xpose.msra.mxu0 0
    %642 = vmatprep.subr.bf16.mxu0 0
    %643 = vmatpush1.bf16.xpose.msra.mxu0 0
    %644 = vmatprep.subr.bf16.mxu0 0
    %645 = vmatpush1.bf16.xpose.msra.mxu0 0
    %646 = vmatprep.subr.bf16.mxu0 0
    %647 = vmatpush1.bf16.xpose.msra.mxu0 0
    %648 = vmatprep.subr.bf16.mxu0 0
    %649 = vmatpush1.bf16.xpose.msra.mxu0 0
    %650 = vmatprep.subr.bf16.mxu0 0
    %651 = vmatpush1.bf16.xpose.msra.mxu0 0
    %652 = vmatprep.subr.bf16.mxu0 0
    %653 = vmatpush1.bf16.xpose.msra.mxu0 0
    %654 = vmatprep.subr.bf16.mxu0 0
    %655 = vmatpush1.bf16.xpose.msra.mxu0 0
    %656 = vmatprep.mubr.bf16.mxu0 0
    %657 = vmatmul.mubr.bf16.gmra.mrb[0].mxu0 %v619
    %v658 = vpop.f32.mrb[0].mxu0
    %v659 = vadd.f32 0.0, %v658
    %v660 = vpop.f32.mrb[0].mxu0
    %v661 = vpop.f32.mrb[0].mxu0
    %v662 = vpop.f32.mrb[0].mxu0
    %663 = vdwg.mxu0
    %v664 = vsel %vm440, %v609, -inf
    %665 = vmax.xlane.f32.xlu0 %v664
    %v666 = vpop.xlane.xlu0 %665
    %v667 = vsel %vm440, %v659, -inf
    %668 = vmax.xlane.f32.xlu0 %v667
    %v669 = vpop.xlane.xlu0 %668
    %v670 = vsub.f32 %v609, %v666
    %v671 = vsub.f32 %v659, %v669
    %v672 = vmul.f32 %v670, 1.442695
    %v673 = vpow.pop %v672
    %v674 = vmul.f32 %v671, 1.442695
    %v675 = vpow.pop %v674
    %v676 = vsel %vm440, %v673, 0.0
    %677 = vadd.xlane.f32.xlu0 %v676
    %v678 = vpop.xlane.xlu0 %677
    %v679 = vsel %vm440, %v675, 0.0
    %680 = vadd.xlane.f32.xlu0 %v679
    %v681 = vpop.xlane.xlu0 %680
    %v682 = vrcp.pop %v678
    %v683 = vrcp.pop %v681
    %v684 = vmul.f32 %v673, %v682
    %v685 = vmul.f32 %v675, %v683
    %v686 = vpack.c.bf16 %v684, %v684
    %v687 = vpack.c.bf16 %v685, %v685
    %688 = vrot.lane.b32.xlu0 %v339, 48
    %v689 = vpop.permute.xlu0 %688
    %v691 = vsel %vm440, %v686, 0
    %v694 = vsel %vm86, %v689, 0
    %696 = vmatprep.subr.bf16.mxu0 0
    %697 = vmatpush1.bf16.msra.mxu0 %v694
    %698 = vmatprep.subr.bf16.mxu0 0
    %699 = vmatpush1.bf16.msra.mxu0 0
    %700 = vmatprep.subr.bf16.mxu0 0
    %701 = vmatpush1.bf16.msra.mxu0 0
    %702 = vmatprep.subr.bf16.mxu0 0
    %703 = vmatpush1.bf16.msra.mxu0 0
    %704 = vmatprep.subr.bf16.mxu0 0
    %705 = vmatpush1.bf16.msra.mxu0 0
    %706 = vmatprep.subr.bf16.mxu0 0
    %707 = vmatpush1.bf16.msra.mxu0 0
    %708 = vmatprep.subr.bf16.mxu0 0
    %709 = vmatpush1.bf16.msra.mxu0 0
    %710 = vmatprep.subr.bf16.mxu0 0
    %711 = vmatpush1.bf16.msra.mxu0 0
    %712 = vmatprep.subr.bf16.mxu0 0
    %713 = vmatpush1.bf16.msra.mxu0 0
    %714 = vmatprep.subr.bf16.mxu0 0
    %715 = vmatpush1.bf16.msra.mxu0 0
    %716 = vmatprep.subr.bf16.mxu0 0
    %717 = vmatpush1.bf16.msra.mxu0 0
    %718 = vmatprep.subr.bf16.mxu0 0
    %719 = vmatpush1.bf16.msra.mxu0 0
    %720 = vmatprep.subr.bf16.mxu0 0
    %721 = vmatpush1.bf16.msra.mxu0 0
    %722 = vmatprep.subr.bf16.mxu0 0
    %723 = vmatpush1.bf16.msra.mxu0 0
    %724 = vmatprep.subr.bf16.mxu0 0
    %725 = vmatpush1.bf16.msra.mxu0 0
    %726 = vmatprep.subr.bf16.mxu0 0
    %727 = vmatpush1.bf16.msra.mxu0 0
    %728 = vmatprep.mubr.bf16.mxu0 0
    %729 = vmatmul.mubr.bf16.gmra.mrb[0].mxu0 %v691
    %v730 = vpop.f32.mrb[0].mxu0
    %v731 = vadd.f32 0.0, %v730
    %v732 = vpop.f32.mrb[0].mxu0
    %v733 = vpop.f32.mrb[0].mxu0
    %v734 = vpop.f32.mrb[0].mxu0
    %735 = vdwg.mxu0
    %736 = vrot.lane.b32.xlu0 %v340, 48
    %v737 = vpop.permute.xlu0 %736
    %v739 = vsel %vm440, %v687, 0
    %v742 = vsel %vm86, %v737, 0
    %744 = vmatprep.subr.bf16.mxu0 0
    %745 = vmatpush1.bf16.msra.mxu0 %v742
    %746 = vmatprep.subr.bf16.mxu0 0
    %747 = vmatpush1.bf16.msra.mxu0 0
    %748 = vmatprep.subr.bf16.mxu0 0
    %749 = vmatpush1.bf16.msra.mxu0 0
    %750 = vmatprep.subr.bf16.mxu0 0
    %751 = vmatpush1.bf16.msra.mxu0 0
    %752 = vmatprep.subr.bf16.mxu0 0
    %753 = vmatpush1.bf16.msra.mxu0 0
    %754 = vmatprep.subr.bf16.mxu0 0
    %755 = vmatpush1.bf16.msra.mxu0 0
    %756 = vmatprep.subr.bf16.mxu0 0
    %757 = vmatpush1.bf16.msra.mxu0 0
    %758 = vmatprep.subr.bf16.mxu0 0
    %759 = vmatpush1.bf16.msra.mxu0 0
    %760 = vmatprep.subr.bf16.mxu0 0
    %761 = vmatpush1.bf16.msra.mxu0 0
    %762 = vmatprep.subr.bf16.mxu0 0
    %763 = vmatpush1.bf16.msra.mxu0 0
    %764 = vmatprep.subr.bf16.mxu0 0
    %765 = vmatpush1.bf16.msra.mxu0 0
    %766 = vmatprep.subr.bf16.mxu0 0
    %767 = vmatpush1.bf16.msra.mxu0 0
    %768 = vmatprep.subr.bf16.mxu0 0
    %769 = vmatpush1.bf16.msra.mxu0 0
    %770 = vmatprep.subr.bf16.mxu0 0
    %771 = vmatpush1.bf16.msra.mxu0 0
    %772 = vmatprep.subr.bf16.mxu0 0
    %773 = vmatpush1.bf16.msra.mxu0 0
    %774 = vmatprep.subr.bf16.mxu0 0
    %775 = vmatpush1.bf16.msra.mxu0 0
    %776 = vmatprep.mubr.bf16.mxu0 0
    %777 = vmatmul.mubr.bf16.gmra.mrb[0].mxu0 %v739
    %v778 = vpop.f32.mrb[0].mxu0
    %v779 = vadd.f32 0.0, %v778
    %v780 = vpop.f32.mrb[0].mxu0
    %v781 = vpop.f32.mrb[0].mxu0
    %v782 = vpop.f32.mrb[0].mxu0
    %783 = vdwg.mxu0
    %v784 = vpack.c.bf16 %v779, %v731
    %v785 = vld [vmem:[#allocation2 + $0x24] sm:$0xf]
    %v786 = vld [vmem:[#allocation2 + $0x34] sm:$0xf]
    %v789 = vunpack.c.l.b16 %v785
    %v790 = vunpack.c.l.b16 %v786
    %v791 = vpack.c.b16 %v790, %v789
    %v794 = vsel %vm344, %v784, 0
    %796 = vmatprep.subr.bf16.mxu0 0
    %797 = vmatpush1.bf16.msra.mxu0 %v791
    %798 = vmatprep.subr.bf16.mxu0 0
    %799 = vmatpush1.bf16.msra.mxu0 0
    %800 = vmatprep.subr.bf16.mxu0 0
    %801 = vmatpush1.bf16.msra.mxu0 0
    %802 = vmatprep.subr.bf16.mxu0 0
    %803 = vmatpush1.bf16.msra.mxu0 0
    %804 = vmatprep.subr.bf16.mxu0 0
    %805 = vmatpush1.bf16.msra.mxu0 0
    %806 = vmatprep.subr.bf16.mxu0 0
    %807 = vmatpush1.bf16.msra.mxu0 0
    %808 = vmatprep.subr.bf16.mxu0 0
    %809 = vmatpush1.bf16.msra.mxu0 0
    %810 = vmatprep.subr.bf16.mxu0 0
    %811 = vmatpush1.bf16.msra.mxu0 0
    %812 = vmatprep.subr.bf16.mxu0 0
    %813 = vmatpush1.bf16.msra.mxu0 0
    %814 = vmatprep.subr.bf16.mxu0 0
    %815 = vmatpush1.bf16.msra.mxu0 0
    %816 = vmatprep.subr.bf16.mxu0 0
    %817 = vmatpush1.bf16.msra.mxu0 0
    %818 = vmatprep.subr.bf16.mxu0 0
    %819 = vmatpush1.bf16.msra.mxu0 0
    %820 = vmatprep.subr.bf16.mxu0 0
    %821 = vmatpush1.bf16.msra.mxu0 0
    %822 = vmatprep.subr.bf16.mxu0 0
    %823 = vmatpush1.bf16.msra.mxu0 0
    %824 = vmatprep.subr.bf16.mxu0 0
    %825 = vmatpush1.bf16.msra.mxu0 0
    %826 = vmatprep.subr.bf16.mxu0 0
    %827 = vmatpush1.bf16.msra.mxu0 0
    %828 = vmatprep.mubr.bf16.mxu0 0
    %829 = vmatmul.mubr.bf16.gmra.mrb[0].mxu0 %v794
    %v830 = vpop.f32.mrb[0].mxu0
    %v831 = vadd.f32 0.0, %v830
    %v832 = vpop.f32.mrb[0].mxu0
    %v833 = vpop.f32.mrb[0].mxu0
    %v834 = vadd.f32 0.0, %v833
    %v835 = vpop.f32.mrb[0].mxu0
    %836 = vdwg.mxu0
    %v839 = vunpack.c.l.b16 %v562
    %v840 = vunpack.c.l.b16 %v563
    %v841 = vpack.c.b16 %v840, %v839
    %v844 = vsel %vm344, %v561, 0
    %846 = vmatprep.subr.bf16.mxu0 0
    %847 = vmatpush1.bf16.msra.mxu0 %v841
    %848 = vmatprep.subr.bf16.mxu0 0
    %849 = vmatpush1.bf16.msra.mxu0 0
    %850 = vmatprep.subr.bf16.mxu0 0
    %851 = vmatpush1.bf16.msra.mxu0 0
    %852 = vmatprep.subr.bf16.mxu0 0
    %853 = vmatpush1.bf16.msra.mxu0 0
    %854 = vmatprep.subr.bf16.mxu0 0
    %855 = vmatpush1.bf16.msra.mxu0 0
    %856 = vmatprep.subr.bf16.mxu0 0
    %857 = vmatpush1.bf16.msra.mxu0 0
    %858 = vmatprep.subr.bf16.mxu0 0
    %859 = vmatpush1.bf16.msra.mxu0 0
    %860 = vmatprep.subr.bf16.mxu0 0
    %861 = vmatpush1.bf16.msra.mxu0 0
    %862 = vmatprep.subr.bf16.mxu0 0
    %863 = vmatpush1.bf16.msra.mxu0 0
    %864 = vmatprep.subr.bf16.mxu0 0
    %865 = vmatpush1.bf16.msra.mxu0 0
    %866 = vmatprep.subr.bf16.mxu0 0
    %867 = vmatpush1.bf16.msra.mxu0 0
    %868 = vmatprep.subr.bf16.mxu0 0
    %869 = vmatpush1.bf16.msra.mxu0 0
    %870 = vmatprep.subr.bf16.mxu0 0
    %871 = vmatpush1.bf16.msra.mxu0 0
    %872 = vmatprep.subr.bf16.mxu0 0
    %873 = vmatpush1.bf16.msra.mxu0 0
    %874 = vmatprep.subr.bf16.mxu0 0
    %875 = vmatpush1.bf16.msra.mxu0 0
    %876 = vmatprep.subr.bf16.mxu0 0
    %877 = vmatpush1.bf16.msra.mxu0 0
    %878 = vmatprep.mubr.bf16.mxu0 0
    %879 = vmatmul.mubr.bf16.gmra.mrb[0].mxu0 %v844
    %v880 = vpop.f32.mrb[0].mxu0
    %v881 = vadd.f32 %v831, %v880
    %v882 = vpop.f32.mrb[0].mxu0
    %v883 = vpop.f32.mrb[0].mxu0
    %v884 = vadd.f32 %v834, %v883
    %v885 = vpop.f32.mrb[0].mxu0
    %886 = vdwg.mxu0
    %v887 = vlaneseq
    %v888 = vshrl.u32 %v887, 7
    %v889 = vsub.s32 0, %v888
    %v890 = vrot.slane %v35, %v889
    %v891 = vadd.f32 %v881, %v890
    %v892 = vadd.f32 %v884, %v890
    %v893 = vadd.f32 %v271, %v891
    %v894 = vadd.f32 %v272, %v892
    %v895 = vsel %vm294, %v893, 0.0
    %896 = vadd.xlane.f32.xlu0 %v895
    %v897 = vpop.xlane.xlu0 %896
    %v898 = vsel %vm294, %v894, 0.0
    %899 = vadd.xlane.f32.xlu0 %v898
    %v900 = vpop.xlane.xlu0 %899
    %v901 = vrcp.pop 32.0
    %v902 = vmul.f32 %v897, %v901
    %v903 = vmul.f32 %v900, %v901
    %v904 = vmul.f32 %v893, %v893
    %v905 = vmul.f32 %v894, %v894
    %v906 = vsel %vm294, %v904, 0.0
    %907 = vadd.xlane.f32.xlu0 %v906
    %v908 = vpop.xlane.xlu0 %907
    %v909 = vsel %vm294, %v905, 0.0
    %910 = vadd.xlane.f32.xlu0 %v909
    %v911 = vpop.xlane.xlu0 %910
    %v912 = vmul.f32 %v908, %v901
    %v913 = vmul.f32 %v911, %v901
    %v914 = vmul.f32 %v902, %v902
    %v915 = vmul.f32 %v903, %v903
    %v916 = vsub.f32 %v912, %v914
    %v917 = vsub.f32 %v913, %v915
    %v918 = vsub.f32 %v893, %v902
    %v919 = vsub.f32 %v894, %v903
    %v920 = vadd.f32 %v916, 1e-05
    %v921 = vadd.f32 %v917, 1e-05
    %v922 = vrsqrt.pop %v920
    %v923 = vrsqrt.pop %v921
    %v924 = vmul.f32 %v918, %v922
    %v925 = vmul.f32 %v919, %v923
    %v926 = vlaneseq
    %v927 = vshrl.u32 %v926, 7
    %v928 = vsub.s32 0, %v927
    %v929 = vrot.slane %v38, %v928
    %v930 = vmul.f32 %v924, %v929
    %v931 = vmul.f32 %v925, %v929
    %v932 = vlaneseq
    %v933 = vshrl.u32 %v932, 7
    %v934 = vsub.s32 0, %v933
    %v935 = vrot.slane %v39, %v934
    %v936 = vadd.f32 %v930, %v935
    %v937 = vadd.f32 %v931, %v935
    %v938 = vpack.c.bf16 %v937, %v936
    %v939 = vld [vmem:[#allocation2 + $0x8] sm:$0xf]
    %v940 = vld [vmem:[#allocation2 + $0x18] sm:$0xf]
    %v941 = vld [vmem:[#allocation2 + $0x28] sm:$0xf]
    %v942 = vld [vmem:[#allocation2 + $0x38] sm:$0xf]
    %v943 = vlaneseq
    %v944 = vshrl.u32 %v943, 7
    %v945 = vsub.s32 0, %v944
    %v946 = vrot.slane %v36, %v945
    %v951 = vunpack.c.l.b16 %v939
    %v952 = vunpack.c.l.b16 %v940
    %v953 = vunpack.c.l.b16 %v941
    %v954 = vunpack.c.l.b16 %v942
    %v955 = vpack.c.b16 %v952, %v951
    %v956 = vpack.c.b16 %v954, %v953
    %v960 = vsel %vm294, %v938, 0
    %962 = vmatprep.subr.bf16.mxu0 0
    %963 = vmatpush1.bf16.msra.mxu0 %v955
    %964 = vmatprep.subr.bf16.mxu0 0
    %965 = vmatpush1.bf16.msra.mxu0 %v956
    %966 = vmatprep.subr.bf16.mxu0 0
    %967 = vmatpush1.bf16.msra.mxu0 0
    %968 = vmatprep.subr.bf16.mxu0 0
    %969 = vmatpush1.bf16.msra.mxu0 0
    %970 = vmatprep.subr.bf16.mxu0 0
    %971 = vmatpush1.bf16.msra.mxu0 0
    %972 = vmatprep.subr.bf16.mxu0 0
    %973 = vmatpush1.bf16.msra.mxu0 0
    %974 = vmatprep.subr.bf16.mxu0 0
    %975 = vmatpush1.bf16.msra.mxu0 0
    %976 = vmatprep.subr.bf16.mxu0 0
    %977 = vmatpush1.bf16.msra.mxu0 0
    %978 = vmatprep.subr.bf16.mxu0 0
    %979 = vmatpush1.bf16.msra.mxu0 0
    %980 = vmatprep.subr.bf16.mxu0 0
    %981 = vmatpush1.bf16.msra.mxu0 0
    %982 = vmatprep.subr.bf16.mxu0 0
    %983 = vmatpush1.bf16.msra.mxu0 0
    %984 = vmatprep.subr.bf16.mxu0 0
    %985 = vmatpush1.bf16.msra.mxu0 0
    %986 = vmatprep.subr.bf16.mxu0 0
    %987 = vmatpush1.bf16.msra.mxu0 0
    %988 = vmatprep.subr.bf16.mxu0 0
    %989 = vmatpush1.bf16.msra.mxu0 0
    %990 = vmatprep.subr.bf16.mxu0 0
    %991 = vmatpush1.bf16.msra.mxu0 0
    %992 = vmatprep.subr.bf16.mxu0 0
    %993 = vmatpush1.bf16.msra.mxu0 0
    %994 = vmatprep.mubr.bf16.mxu0 0
    %995 = vmatmul.mubr.bf16.gmra.mrb[0].mxu0 %v960
    %v996 = vpop.f32.mrb[0].mxu0
    %v997 = vadd.f32 %v946, %v996
    %v998 = vpop.f32.mrb[0].mxu0
    %v999 = vpop.f32.mrb[0].mxu0
    %v1000 = vadd.f32 %v946, %v999
    %v1001 = vpop.f32.mrb[0].mxu0
    %1002 = vdwg.mxu0
    %v1003 = vmax.f32 %v997, 0.0
    %v1004 = vmax.f32 %v1000, 0.0
    %v1005 = vpack.c.bf16 %v1004, %v1003
    %v1006 = vld [vmem:[%s2] sm:$0xf]
    %v1007 = vld [vmem:[%s2 + $0x4] sm:$0xf]
    %v1008 = vld [vmem:[%s2 + $0x8] sm:$0xf]
    %v1009 = vld [vmem:[%s2 + $0xc] sm:$0xf]
    %v1010 = vld [vmem:[%s2 + $0x10] sm:$0xf]
    %v1011 = vld [vmem:[%s2 + $0x14] sm:$0xf]
    %v1012 = vld [vmem:[%s2 + $0x18] sm:$0xf]
    %v1013 = vld [vmem:[%s2 + $0x1c] sm:$0xf]
    %v1014 = vlaneseq
    %v1015 = vshrl.u32 %v1014, 7
    %v1016 = vsub.s32 0, %v1015
    %v1017 = vrot.slane %v37, %v1016
    %v1026 = vunpack.c.l.b16 %v1006
    %v1027 = vunpack.c.l.b16 %v1007
    %v1028 = vunpack.c.l.b16 %v1008
    %v1029 = vunpack.c.l.b16 %v1009
    %v1030 = vunpack.c.l.b16 %v1010
    %v1031 = vunpack.c.l.b16 %v1011
    %v1032 = vunpack.c.l.b16 %v1012
    %v1033 = vunpack.c.l.b16 %v1013
    %v1034 = vpack.c.b16 %v1027, %v1026
    %v1035 = vpack.c.b16 %v1029, %v1028
    %v1036 = vpack.c.b16 %v1031, %v1030
    %v1037 = vpack.c.b16 %v1033, %v1032
    %vm1042 = vcmask 523264
    %v1044 = vsel %vm1042, %v1005, 0
    %1046 = vmatprep.subr.bf16.mxu0 0
    %1047 = vmatpush1.bf16.msra.mxu0 %v1034
    %1048 = vmatprep.subr.bf16.mxu0 0
    %1049 = vmatpush1.bf16.msra.mxu0 %v1035
    %1050 = vmatprep.subr.bf16.mxu0 0
    %1051 = vmatpush1.bf16.msra.mxu0 %v1036
    %1052 = vmatprep.subr.bf16.mxu0 0
    %1053 = vmatpush1.bf16.msra.mxu0 %v1037
    %1054 = vmatprep.subr.bf16.mxu0 0
    %1055 = vmatpush1.bf16.msra.mxu0 0
    %1056 = vmatprep.subr.bf16.mxu0 0
    %1057 = vmatpush1.bf16.msra.mxu0 0
    %1058 = vmatprep.subr.bf16.mxu0 0
    %1059 = vmatpush1.bf16.msra.mxu0 0
    %1060 = vmatprep.subr.bf16.mxu0 0
    %1061 = vmatpush1.bf16.msra.mxu0 0
    %1062 = vmatprep.subr.bf16.mxu0 0
    %1063 = vmatpush1.bf16.msra.mxu0 0
    %1064 = vmatprep.subr.bf16.mxu0 0
    %1065 = vmatpush1.bf16.msra.mxu0 0
    %1066 = vmatprep.subr.bf16.mxu0 0
    %1067 = vmatpush1.bf16.msra.mxu0 0
    %1068 = vmatprep.subr.bf16.mxu0 0
    %1069 = vmatpush1.bf16.msra.mxu0 0
    %1070 = vmatprep.subr.bf16.mxu0 0
    %1071 = vmatpush1.bf16.msra.mxu0 0
    %1072 = vmatprep.subr.bf16.mxu0 0
    %1073 = vmatpush1.bf16.msra.mxu0 0
    %1074 = vmatprep.subr.bf16.mxu0 0
    %1075 = vmatpush1.bf16.msra.mxu0 0
    %1076 = vmatprep.subr.bf16.mxu0 0
    %1077 = vmatpush1.bf16.msra.mxu0 0
    %1078 = vmatprep.mubr.bf16.mxu0 0
    %1079 = vmatmul.mubr.bf16.gmra.mrb[0].mxu0 %v1044
    %v1080 = vpop.f32.mrb[0].mxu0
    %v1081 = vadd.f32 %v1017, %v1080
    %v1082 = vpop.f32.mrb[0].mxu0
    %v1083 = vpop.f32.mrb[0].mxu0
    %v1084 = vadd.f32 %v1017, %v1083
    %v1085 = vpop.f32.mrb[0].mxu0
    %1086 = vdwg.mxu0
    %v1087 = vadd.f32 %v936, %v1081
    %v1088 = vadd.f32 %v937, %v1084
    %v1089 = vsel %vm294, %v1087, 0.0
    %1090 = vadd.xlane.f32.xlu0 %v1089
    %v1091 = vpop.xlane.xlu0 %1090
    %v1092 = vsel %vm294, %v1088, 0.0
    %1093 = vadd.xlane.f32.xlu0 %v1092
    %v1094 = vpop.xlane.xlu0 %1093
    %v1095 = vmul.f32 %v1091, %v901
    %v1096 = vmul.f32 %v1094, %v901
    %v1097 = vmul.f32 %v1087, %v1087
    %v1098 = vmul.f32 %v1088, %v1088
    %v1099 = vsel %vm294, %v1097, 0.0
    %1100 = vadd.xlane.f32.xlu0 %v1099
    %v1101 = vpop.xlane.xlu0 %1100
    %v1102 = vsel %vm294, %v1098, 0.0
    %1103 = vadd.xlane.f32.xlu0 %v1102
    %v1104 = vpop.xlane.xlu0 %1103
    %v1105 = vmul.f32 %v1101, %v901
    %v1106 = vmul.f32 %v1104, %v901
    %v1107 = vmul.f32 %v1095, %v1095
    %v1108 = vmul.f32 %v1096, %v1096
    %v1109 = vsub.f32 %v1105, %v1107
    %v1110 = vsub.f32 %v1106, %v1108
    %v1111 = vsub.f32 %v1087, %v1095
    %v1112 = vsub.f32 %v1088, %v1096
    %v1113 = vadd.f32 %v1109, 1e-05
    %v1114 = vadd.f32 %v1110, 1e-05
    %v1115 = vrsqrt.pop %v1113
    %v1116 = vrsqrt.pop %v1114
    %v1117 = vmul.f32 %v1111, %v1115
    %v1118 = vmul.f32 %v1112, %v1116
    %v1119 = vlaneseq
    %v1120 = vshrl.u32 %v1119, 7
    %v1121 = vsub.s32 0, %v1120
    %v1122 = vrot.slane %v40, %v1121
    %v1123 = vmul.f32 %v1117, %v1122
    %v1124 = vmul.f32 %v1118, %v1122
    %v1125 = vlaneseq
    %v1126 = vshrl.u32 %v1125, 7
    %v1127 = vsub.s32 0, %v1126
    %v1128 = vrot.slane %v41, %v1127
    %v1129 = vadd.f32 %v1123, %v1128
    %v1130 = vadd.f32 %v1124, %v1128
    %v1131 = vsel %vm294, %v1129, 0.0
    %1132 = vadd.xlane.f32.xlu0 %v1131
    %v1133 = vpop.xlane.xlu0 %1132
    %v1134 = vsel %vm294, %v1130, 0.0
    %1135 = vadd.xlane.f32.xlu0 %v1134
    %v1136 = vpop.xlane.xlu0 %1135
    %v1137 = vmul.f32 %v1133, %v901
    %v1138 = vmul.f32 %v1136, %v901
    %v1139 = vmul.f32 %v1129, %v1129
    %v1140 = vmul.f32 %v1130, %v1130
    %v1141 = vsel %vm294, %v1139, 0.0
    %1142 = vadd.xlane.f32.xlu0 %v1141
    %v1143 = vpop.xlane.xlu0 %1142
    %v1144 = vsel %vm294, %v1140, 0.0
    %1145 = vadd.xlane.f32.xlu0 %v1144
    %v1146 = vpop.xlane.xlu0 %1145
    %v1147 = vmul.f32 %v1143, %v901
    %v1148 = vmul.f32 %v1146, %v901
    %v1149 = vmul.f32 %v1137, %v1137
    %v1150 = vmul.f32 %v1138, %v1138
    %v1151 = vsub.f32 %v1147, %v1149
    %v1152 = vsub.f32 %v1148, %v1150
    %v1153 = vsub.f32 %v1129, %v1137
    %v1154 = vsub.f32 %v1130, %v1138
    %v1155 = vadd.f32 %v1151, 1e-05
    %v1156 = vadd.f32 %v1152, 1e-05
    %v1157 = vrsqrt.pop %v1155
    %v1158 = vrsqrt.pop %v1156
    %v1159 = vmul.f32 %v1153, %v1157
    %v1160 = vmul.f32 %v1154, %v1158
    %v1161 = vlaneseq
    %v1162 = vshrl.u32 %v1161, 7
    %v1163 = vsub.s32 0, %v1162
    %v1164 = vrot.slane %v42, %v1163
    %v1165 = vmul.f32 %v1159, %v1164
    %v1166 = vmul.f32 %v1160, %v1164
    %v1167 = vlaneseq
    %v1168 = vshrl.u32 %v1167, 7
    %v1169 = vsub.s32 0, %v1168
    %v1170 = vrot.slane %v43, %v1169
    %v1171 = vadd.f32 %v1165, %v1170
    %v1172 = vadd.f32 %v1166, %v1170
    %v1173 = vsel %vm294, %v1171, 0.0
    %v1174 = vrot.slane %v1173, 4
    %v1175 = vadd.f32 %v1173, %v1174
    %v1176 = vrot.slane %v1175, 2
    %v1177 = vadd.f32 %v1175, %v1176
    %v1178 = vrot.slane %v1177, 1
    %v1179 = vadd.f32 %v1177, %v1178
    %v1180 = vsel %vm294, %v1172, 0.0
    %v1181 = vrot.slane %v1180, 4
    %v1182 = vadd.f32 %v1180, %v1181
    %v1183 = vrot.slane %v1182, 2
    %v1184 = vadd.f32 %v1182, %v1183
    %v1185 = vrot.slane %v1184, 1
    %v1186 = vadd.f32 %v1184, %v1185
    %v1187 = vpack.c.bf16 %v1179, %v1179
    %v1188 = vpack.c.bf16 %v1186, %v1186
    %v1189 = vld [vmem:[#allocation2 + $0xc] sm:$0xf]
    %v1190 = vld [vmem:[#allocation2 + $0x1c] sm:$0xf]
    %v1191 = vld [vmem:[#allocation2 + $0x2c] sm:$0xf]
    %v1192 = vld [vmem:[#allocation2 + $0x3c] sm:$0xf]
    %v1193 = vlaneseq
    %v1194 = vshrl.u32 %v1193, 7
    %v1195 = vsub.s32 0, %v1194
    %v1196 = vrot.slane %v44, %v1195
    %v1199 = vunpack.c.l.b16 %v1187
    %v1200 = vunpack.c.l.b16 %v1188
    %vm1201 = vcmask 1041409
    %v1202 = vsel %vm1201, %v1200, %v1199
    %v1203 = vpack.c.b16 %v1202, %v1202
    %v1208 = vunpack.c.l.b16 %v1189
    %v1209 = vunpack.c.l.b16 %v1190
    %v1210 = vunpack.c.l.b16 %v1191
    %v1211 = vunpack.c.l.b16 %v1192
    %v1212 = vpack.c.b16 %v1209, %v1208
    %v1213 = vpack.c.b16 %v1211, %v1210
    %v1217 = vsel %vm294, %v1203, 0
    %1219 = vmatprep.subr.bf16.mxu0 0
    %1220 = vmatpush1.bf16.msra.mxu0 %v1212
    %1221 = vmatprep.subr.bf16.mxu0 0
    %1222 = vmatpush1.bf16.msra.mxu0 %v1213
    %1223 = vmatprep.subr.bf16.mxu0 0
    %1224 = vmatpush1.bf16.msra.mxu0 0
    %1225 = vmatprep.subr.bf16.mxu0 0
    %1226 = vmatpush1.bf16.msra.mxu0 0
    %1227 = vmatprep.subr.bf16.mxu0 0
    %1228 = vmatpush1.bf16.msra.mxu0 0
    %1229 = vmatprep.subr.bf16.mxu0 0
    %1230 = vmatpush1.bf16.msra.mxu0 0
    %1231 = vmatprep.subr.bf16.mxu0 0
    %1232 = vmatpush1.bf16.msra.mxu0 0
    %1233 = vmatprep.subr.bf16.mxu0 0
    %1234 = vmatpush1.bf16.msra.mxu0 0
    %1235 = vmatprep.subr.bf16.mxu0 0
    %1236 = vmatpush1.bf16.msra.mxu0 0
    %1237 = vmatprep.subr.bf16.mxu0 0
    %1238 = vmatpush1.bf16.msra.mxu0 0
    %1239 = vmatprep.subr.bf16.mxu0 0
    %1240 = vmatpush1.bf16.msra.mxu0 0
    %1241 = vmatprep.subr.bf16.mxu0 0
    %1242 = vmatpush1.bf16.msra.mxu0 0
    %1243 = vmatprep.subr.bf16.mxu0 0
    %1244 = vmatpush1.bf16.msra.mxu0 0
    %1245 = vmatprep.subr.bf16.mxu0 0
    %1246 = vmatpush1.bf16.msra.mxu0 0
    %1247 = vmatprep.subr.bf16.mxu0 0
    %1248 = vmatpush1.bf16.msra.mxu0 0
    %1249 = vmatprep.subr.bf16.mxu0 0
    %1250 = vmatpush1.bf16.msra.mxu0 0
    %1251 = vmatprep.mubr.bf16.mxu0 0
    %1252 = vmatmul.mubr.bf16.gmra.mrb[0].mxu0 %v1217
    %v1253 = vpop.f32.mrb[0].mxu0
    %v1254 = vadd.f32 %v1196, %v1253
    %v1255 = vpop.f32.mrb[0].mxu0
    %v1256 = vpop.f32.mrb[0].mxu0
    %v1257 = vpop.f32.mrb[0].mxu0
    %1258 = vdwg.mxu0
    %vm1259 = vcmask 9216
    %1260 = vst.msk [vmem:[#allocation5] sm:$0x3] %vm1259, %v1254
    // Predicated region
    $region22: #{transformer_classifier.1} parent=1 // pred_check
      _
    $region23: #{transformer_classifier.1} parent=1 // pred_check_branch
      %1262 = sbr.rel (0) target = $region25
    $region24: #{transformer_classifier.1} parent=1 // pred_region
      %s1264 = ssub.s32 32, 32
      %1265 = vsyncadd [#allocation4], %s1264
      %s1267 = sshll.u32 [#allocation5], 4
      %s1268 = int_to_ptr.vmem [resolvable:$true] %s1267
      %1270 = dma.vmem_to_hbm [thread:$0]  %s1268, 32, %s4, [#allocation4]
    $region25: #{transformer_classifier.1} parent=1 // pred_fallthru
      _
    // Predicated region
    $region26: #{transformer_classifier.1} parent=1 // pred_check
      _
    $region27: #{transformer_classifier.1} parent=1 // pred_check_branch
      %1272 = sbr.rel (0) target = $region29
    $region28: #{transformer_classifier.1} parent=1 // pred_region
      %1273 = dma.done [#allocation4], 32
    $region29: #{transformer_classifier.1} parent=1 // pred_fallthru
      _
    %1274 = vsyncpa [#allocation3], 1
    %1275 = vsyncpa [#allocation4], 1

</llo_original>
